<compile_context>
chip_gen: v7x
topology: tpu7x:2x2x1
jax: 0.10.0
libtpu: 0.0.40
codegen_flags: <defaults>
</compile_context>

<pallas_src>
import functools
import math

import numpy as np
import jax
import jax.numpy as jnp
from jax import lax
from jax.experimental import pallas as pl
from jax.experimental.pallas import tpu as pltpu

# ----------------------------- model dimensions -----------------------------
LATENT = 40              # self.latent_dim
ENC_HID = 128            # set-encoder hidden width
HYPER_HID = 128          # hyper-net hidden width
HYPO_IN = 6
HYPO_HID = 60
HYPO_OUT = 3

# hypo net: SingleBVPNet(hidden=60, num_hidden_layers=3, outermost_linear=True)
HYPO_LAYER_DIMS = [(HYPO_IN, HYPO_HID),
                   (HYPO_HID, HYPO_HID),
                   (HYPO_HID, HYPO_HID),
                   (HYPO_HID, HYPO_HID),
                   (HYPO_HID, HYPO_OUT)]
NUM_HYPO_LAYERS = len(HYPO_LAYER_DIMS)


def _round_up(x, m):
    return ((x + m - 1) // m) * m


# "big" hyper heads: the three 60x60 weight heads (hypo layers 1..3).
BIG_LAYERS = (1, 2, 3)
BIG_REAL = HYPO_HID * HYPO_HID          # 3600
BIG_PAD = _round_up(BIG_REAL, 256)      # 3840 -> two 128-multiple halves
BIG_HALF = BIG_PAD // 2                 # 1920

# "small" hyper heads: layer-0 / layer-4 weight heads + all 5 bias heads.
# Each head is padded to the next 128 multiple and concatenated column-wise.
SMALL_HEADS = []     # (kind, hypo_layer, real_out_dim, padded_out_dim, col_offset)
_off = 0
for _kind, _l in (("weight", 0), ("weight", 4),
                  ("bias", 0), ("bias", 1), ("bias", 2), ("bias", 3), ("bias", 4)):
    _fi, _fo = HYPO_LAYER_DIMS[_l]
    _od = _fo * _fi if _kind == "weight" else _fo
    _pad = _round_up(_od, 128)
    SMALL_HEADS.append((_kind, _l, _od, _pad, _off))
    _off += _pad
SMALL_TOTAL = _off                       # 384 + 256 + 5*128 = 1280
NUM_SMALL = len(SMALL_HEADS)             # 7

MAX_TILE_N = 1024    # sample-axis tile (multiple of 8); sweepable 512-2048


def _tile_n(n, max_tile=MAX_TILE_N):
    """Full N when small (block == full dim), else MAX_TILE_N with a cdiv grid."""
    return n if n <= max_tile else max_tile


# ------------------------------ Pallas kernels -------------------------------
def set_encoder_kernel(coords_ref, amps_ref, p_ref,
                       w0c, w0p, w0a, b0, w1, b1, w2, b2, w3, b3,
                       out_ref, acc_ref, *, n_total, per_sample_p):
    """Set-encoder MLP on one (batch, sample-tile) block + running mean.

    The [coords | params | amps] concat is fused: the first-layer weight comes
    pre-split into row blocks so the three inputs feed three partial products.
    coords_ref: (1, TN, 6); amps_ref: (1, TN, 3);
    p_ref: SMEM (B, 2) scalars when per_sample_p=False, else VMEM (1, TN, 2).
    out_ref: (1, 1, 40); acc_ref: VMEM (1, 40) accumulator over the sample axis.
    """
    n = pl.program_id(1)

    @pl.when(n == 0)
    def _init():
        acc_ref[...] = jnp.zeros_like(acc_ref)

    x = coords_ref[0]                                  # [TN, 6]
    a = amps_ref[0]                                    # [TN, 3]
    h = jnp.dot(x, w0c[...], preferred_element_type=jnp.float32)
    h += jnp.dot(a, w0a[...], preferred_element_type=jnp.float32)
    if per_sample_p:
        p = p_ref[0]                                   # [TN, 2]
        h += p[:, 0:1] * w0p[0:1, :] + p[:, 1:2] * w0p[1:2, :]
    else:
        b = pl.program_id(0)
        h += p_ref[b, 0] * w0p[0:1, :] + p_ref[b, 1] * w0p[1:2, :]
    h = jnp.maximum(h + b0[...], 0.0)
    h = jnp.maximum(jnp.dot(h, w1[...], preferred_element_type=jnp.float32) + b1[...], 0.0)
    h = jnp.maximum(jnp.dot(h, w2[...], preferred_element_type=jnp.float32) + b2[...], 0.0)
    h = jnp.dot(h, w3[...], preferred_element_type=jnp.float32) + b3[...]   # [TN, 40]

    # cdiv grid: mask rows past the true sample count before accumulating.
    tn = h.shape[0]
    row = n * tn + lax.broadcasted_iota(jnp.int32, h.shape, 0)
    h = jnp.where(row < n_total, h, 0.0)
    acc_ref[...] += jnp.sum(h, axis=0, keepdims=True)

    @pl.when(n == pl.num_programs(1) - 1)
    def _finalize():
        out_ref[0] = acc_ref[...] * (1.0 / float(n_total))   # mean over N samples


def hyper_big_kernel(z_ref, w0, b0, w1, b1, w2, b2, out_ref):
    """One (hypo-layer, column-half) step of the three 60x60 weight heads."""
    z = z_ref[...]                                                            # [B, 40]
    h = jnp.maximum(jnp.dot(z, w0[0], preferred_element_type=jnp.float32) + b0[0], 0.0)
    h = jnp.maximum(jnp.dot(h, w1[0], preferred_element_type=jnp.float32) + b1[0], 0.0)
    out_ref[0] = jnp.dot(h, w2[0], preferred_element_type=jnp.float32) + b2[0]   # [B, 1920]


def hyper_small_kernel(z_ref, w0, b0, w1, b1, w2, b2, out_ref):
    """Layer-0/4 weight heads + all 5 bias heads in one step.

    All 7 heads' first layers are fused into one [40, 896] matmul; their final
    layers are per-head-padded column slices of one [128, 1280] matrix, so
    every store is a dense, 128-aligned slice of the [B, 1280] output slab.
    """
    z = z_ref[...]                                                            # [B, 40]
    h1 = jnp.maximum(jnp.dot(z, w0[...], preferred_element_type=jnp.float32) + b0[...], 0.0)
    for i, (_kind, _l, _od, pad, off) in enumerate(SMALL_HEADS):
        h1_i = h1[:, i * HYPER_HID:(i + 1) * HYPER_HID]                       # [B, 128]
        h2 = jnp.maximum(jnp.dot(h1_i, w1[i], preferred_element_type=jnp.float32) + b1[i], 0.0)
        out_ref[:, off:off + pad] = (
            jnp.dot(h2, w2[:, off:off + pad], preferred_element_type=jnp.float32)
            + b2[:, off:off + pad])


def hypo_net_kernel(x_ref, w0, b0, w1, b1, w2, b2, w3, b3, w4, b4, o_ref):
    """SingleBVPNet with per-batch hypernet weights on one (batch, sample-tile).

    x_ref: (1, TN, 6); w_i: (1, in_i, out_i) — [in, out] layout so every layer
    is a plain x @ W (no per-tile transposed contraction); b_i: (1, 1, out_i).
    """
    def lin(h, w_ref, b_ref):
        return jnp.dot(h, w_ref[0], preferred_element_type=jnp.float32) + b_ref[0]

    x = x_ref[0]                                  # [TN, 6]
    h = jnp.maximum(lin(x, w0, b0), 0.0)
    h = jnp.maximum(lin(h, w1, b1), 0.0)
    h = jnp.maximum(lin(h, w2, b2), 0.0)
    h = jnp.maximum(lin(h, w3, b3), 0.0)
    o_ref[0] = lin(h, w4, b4)                     # [TN, 3]


# ------------------------------ kernel wrappers ------------------------------
def run_set_encoder(coords, amps, p_arr, per_sample_p, enc):
    """coords [B,N,6], amps [B,N,3], p_arr [B,2] (SMEM) or [B,N,2] -> [B, 40]."""
    B, N, _ = coords.shape
    TN = _tile_n(N)
    n_tiles = pl.cdiv(N, TN)

    weight_names = ("w0c", "w0p", "w0a", "b0", "w1", "b1", "w2", "b2", "w3", "b3")
    weights = [enc[k] for k in weight_names]

    def const_spec(a):
        return pl.BlockSpec(a.shape, lambda b, n, nd=a.ndim: (0,) * nd)

    if per_sample_p:
        p_spec = pl.BlockSpec((1, TN, 2), lambda b, n: (b, n, 0))
    else:
        p_spec = pl.BlockSpec(memory_space=pltpu.MemorySpace.SMEM)

    # Per-step VMEM at TN=1024: inputs ~36 KB (x2 buffers), weights ~160 KB,
    # live activations ~1.5 MB -> well under the 32 MiB scoped default.
    out = pl.pallas_call(
        functools.partial(set_encoder_kernel, n_total=N, per_sample_p=per_sample_p),
        out_shape=jax.ShapeDtypeStruct((B, 1, LATENT), jnp.float32),
        grid=(B, n_tiles),
        in_specs=[pl.BlockSpec((1, TN, 6), lambda b, n: (b, n, 0)),
                  pl.BlockSpec((1, TN, 3), lambda b, n: (b, n, 0)),
                  p_spec] + [const_spec(a) for a in weights],
        out_specs=pl.BlockSpec((1, 1, LATENT), lambda b, n: (b, 0, 0)),
        scratch_shapes=[pltpu.VMEM((1, LATENT), jnp.float32)],
        compiler_params=pltpu.CompilerParams(
            dimension_semantics=("parallel", "arbitrary")),
    )(coords, amps, p_arr, *weights)
    return out[:, 0, :]


def run_hyper_big(z, hb):
    """z [B,40] -> weight-head slab [3, B, BIG_PAD] for hypo layers 1..3."""
    B = z.shape[0]
    # grid = (layer, column-half): 6 equal "parallel" steps -> v7x megacore gets
    # a 3/3 split.  Per-step VMEM: w2 block ~0.98 MB (x2 buffers), hidden
    # weights ~90 KB, out block B*1920*4 -> ~2.2 MB total.
    return pl.pallas_call(
        hyper_big_kernel,
        out_shape=jax.ShapeDtypeStruct((len(BIG_LAYERS), B, BIG_PAD), jnp.float32),
        grid=(len(BIG_LAYERS), 2),
        in_specs=[pl.BlockSpec((B, LATENT), lambda l, c: (0, 0)),
                  pl.BlockSpec((1, LATENT, HYPER_HID), lambda l, c: (l, 0, 0)),
                  pl.BlockSpec((1, 1, HYPER_HID), lambda l, c: (l, 0, 0)),
                  pl.BlockSpec((1, HYPER_HID, HYPER_HID), lambda l, c: (l, 0, 0)),
                  pl.BlockSpec((1, 1, HYPER_HID), lambda l, c: (l, 0, 0)),
                  pl.BlockSpec((1, HYPER_HID, BIG_HALF), lambda l, c: (l, 0, c)),
                  pl.BlockSpec((1, 1, BIG_HALF), lambda l, c: (l, 0, c))],
        out_specs=pl.BlockSpec((1, B, BIG_HALF), lambda l, c: (l, 0, c)),
        compiler_params=pltpu.CompilerParams(
            dimension_semantics=("parallel", "parallel")),
    )(z, hb["w0"], hb["b0"], hb["w1"], hb["b1"], hb["w2"], hb["b2"])


def run_hyper_small(z, hs):
    """z [B,40] -> concatenated small-head slab [B, SMALL_TOTAL]."""
    B = z.shape[0]
    args = (z, hs["w0"], hs["b0"], hs["w1"], hs["b1"], hs["w2"], hs["b2"])

    def full_spec(a):
        return pl.BlockSpec(a.shape, lambda i, nd=a.ndim: (0,) * nd)

    # Single step; total working set ~1.3 MB of weights + B*1280*4 output.
    return pl.pallas_call(
        hyper_small_kernel,
        out_shape=jax.ShapeDtypeStruct((B, SMALL_TOTAL), jnp.float32),
        grid=(1,),
        in_specs=[full_spec(a) for a in args],
        out_specs=pl.BlockSpec((B, SMALL_TOTAL), lambda i: (0, 0)),
        compiler_params=pltpu.CompilerParams(dimension_semantics=("arbitrary",)),
    )(*args)


def run_hypo_net(coords, w_io, b_gen):
    """coords [B,N,6]; w_io[l] [B,in,out]; b_gen[l] [B,out]  ->  [B,N,3]."""
    B, N, _ = coords.shape
    TN = _tile_n(N)
    args = [coords]
    in_specs = [pl.BlockSpec((1, TN, HYPO_IN), lambda b, n: (b, n, 0))]
    for (fi, fo), w, bias in zip(HYPO_LAYER_DIMS, w_io, b_gen):
        args += [w, bias[:, None, :]]            # bias as [B, 1, out]
        in_specs += [pl.BlockSpec((1, fi, fo), lambda b, n: (b, 0, 0)),
                     pl.BlockSpec((1, 1, fo), lambda b, n: (b, 0, 0))]
    # NOTE: output stays [B, N, 3] (masked 3-lane stores).  A lane-dense
    # [B, 3, N] layout would require an extra XLA transpose (a full extra HBM
    # round trip of the output) that outweighs the saved masked vst here.
    return pl.pallas_call(
        hypo_net_kernel,
        out_shape=jax.ShapeDtypeStruct((B, N, HYPO_OUT), jnp.float32),
        grid=(B, pl.cdiv(N, TN)),
        in_specs=in_specs,
        out_specs=pl.BlockSpec((1, TN, HYPO_OUT), lambda b, n: (b, n, 0)),
        compiler_params=pltpu.CompilerParams(
            dimension_semantics=("parallel", "parallel")),
    )(*args)


# ------------------------------ parameter init -------------------------------
def init_model_params(key):
    """Deterministic synthetic init mirroring the PyTorch module's shapes/scales.

    Hyper final-layer columns are stored in [in, out]-major (not PyTorch
    [out, in]-major) order so the generated hypo weights land directly in the
    layout the hypo kernel consumes; loading real PyTorch weights would need
    the matching column permutation (distribution-identical for random init).
    """
    keys = iter(jax.random.split(key, 256))

    def dense(fi, fo, w_scale=None, b_range=None):
        kw, kb = next(keys), next(keys)
        s = math.sqrt(2.0 / fi) if w_scale is None else w_scale        # kaiming-like
        w = (jax.random.normal(kw, (fi, fo)) * s).astype(jnp.float32)
        br = (1.0 / fi) if b_range is None else b_range
        b = jax.random.uniform(kb, (1, fo), jnp.float32, -br, br)
        return w, b

    # ---- set encoder: Linear(11,128) -> 2x Linear(128,128) -> Linear(128,40)
    w0, b0 = dense(6 + 2 + 3, ENC_HID)
    enc = {"w0c": w0[:6], "w0p": w0[6:8], "w0a": w0[8:11], "b0": b0}
    for name, (fi, fo) in (("1", (ENC_HID, ENC_HID)), ("2", (ENC_HID, ENC_HID)),
                           ("3", (ENC_HID, LATENT))):
        w, b = dense(fi, fo)
        enc["w" + name] = w
        enc["b" + name] = b

    # ---- one FCBlock(40 -> 128 -> 128 -> out_dim) per hypo parameter ----
    def head(hypo_fi, out_dim, pad, is_weight):
        w0h, b0h = dense(LATENT, HYPER_HID)
        w1h, b1h = dense(HYPER_HID, HYPER_HID)
        # final hyper layer: kaiming/100 (hyper_weight_init / hyper_bias_init)
        w2h, b2h = dense(HYPER_HID, out_dim,
                         w_scale=math.sqrt(2.0 / HYPER_HID) / 100.0,
                         b_range=(1.0 / hypo_fi) if is_weight else (1.0 / HYPER_HID))
        w2h = jnp.pad(w2h, ((0, 0), (0, pad - out_dim)))   # zero-padded columns
        b2h = jnp.pad(b2h, ((0, 0), (0, pad - out_dim)))
        return w0h, b0h, w1h, b1h, w2h, b2h

    big = {k: [] for k in ("w0", "b0", "w1", "b1", "w2", "b2")}
    for l in BIG_LAYERS:
        fi, fo = HYPO_LAYER_DIMS[l]
        for k, a in zip(("w0", "b0", "w1", "b1", "w2", "b2"),
                        head(fi, fi * fo, BIG_PAD, True)):
            big[k].append(a)
    hyper_big = {k: jnp.stack(v) for k, v in big.items()}

    small = {k: [] for k in ("w0", "b0", "w1", "b1", "w2", "b2")}
    for kind, l, od, pad, _coff in SMALL_HEADS:
        fi, _fo = HYPO_LAYER_DIMS[l]
        for k, a in zip(("w0", "b0", "w1", "b1", "w2", "b2"),
                        head(fi, od, pad, kind == "weight")):
            small[k].append(a)
    hyper_small = {"w0": jnp.concatenate(small["w0"], axis=1),   # [40, 896]
                   "b0": jnp.concatenate(small["b0"], axis=1),   # [1, 896]
                   "w1": jnp.stack(small["w1"]),                 # [7, 128, 128]
                   "b1": jnp.stack(small["b1"]),                 # [7, 1, 128]
                   "w2": jnp.concatenate(small["w2"], axis=1),   # [128, 1280]
                   "b2": jnp.concatenate(small["b2"], axis=1)}   # [1, 1280]

    return {"set_encoder": enc, "hyper_big": hyper_big, "hyper_small": hyper_small}


# ------------------------------- forward (glue) -------------------------------
def _normalize_params_input(p, B, N):
    if p is None:
        return jnp.zeros((B, 2), jnp.float32), False
    p = jnp.asarray(p, jnp.float32)
    if p.ndim == 1:
        assert p.shape == (2,)
        return jnp.broadcast_to(p[None, :], (B, 2)), False
    if p.ndim == 2:
        assert p.shape == (B, 2)
        return p, False
    if p.ndim == 3:
        assert p.shape == (B, N, 2)
        return p, True
    raise ValueError(f"Unsupported 'params' shape: {p.shape}")


def hyper_brdf_forward(params, coords, amps, p=None):
    """coords: [B,N,6], amps: [B,N,3], p: None | [2] | [B,2] | [B,N,2]."""
    B, N, _ = coords.shape
    p_arr, per_sample_p = _normalize_params_input(p, B, N)

    embedding = run_set_encoder(coords, amps, p_arr, per_sample_p,
                                params["set_encoder"])                # [B, 40]

    big = run_hyper_big(embedding, params["hyper_big"])               # [3, B, 3840]
    small = run_hyper_small(embedding, params["hyper_small"])         # [B, 1280]

    # Unpack generated hypo params: [in, out] layout feeds the hypo kernel
    # directly (static 128-aligned slices); only the returned PyTorch-layout
    # dict is transposed.
    w_io = [None] * NUM_HYPO_LAYERS
    b_gen = [None] * NUM_HYPO_LAYERS
    for bi, l in enumerate(BIG_LAYERS):
        fi, fo = HYPO_LAYER_DIMS[l]
        w_io[l] = big[bi, :, :fi * fo].reshape(B, fi, fo)
    for kind, l, od, _pad, off in SMALL_HEADS:
        fi, fo = HYPO_LAYER_DIMS[l]
        if kind == "weight":
            w_io[l] = small[:, off:off + od].reshape(B, fi, fo)
        else:
            b_gen[l] = small[:, off:off + od]

    model_out = run_hypo_net(coords, w_io, b_gen)                     # [B, N, 3]

    # TODO(synk): model_in's clone()/detach()/requires_grad_ bookkeeping is
    # autograd-only and has no JAX forward equivalent; coords is returned as-is.
    hypo_params = {}
    for l in range(NUM_HYPO_LAYERS):
        hypo_params[f"net.net.{l}.0.weight"] = jnp.swapaxes(w_io[l], -1, -2)  # [B,out,in]
        hypo_params[f"net.net.{l}.0.bias"] = b_gen[l]                          # [B,out]

    return {"model_in": coords, "model_out": model_out,
            "latent_vec": embedding, "hypo_params": hypo_params}


# ---------------------------- pure-JAX reference ------------------------------
def _reference_forward(params, coords, amps, p=None):
    """Pure-JAX reference of the same forward (HIGHEST matmul precision)."""
    B, N, _ = coords.shape
    p_arr, per_sample_p = _normalize_params_input(p, B, N)
    p_full = p_arr if per_sample_p else jnp.broadcast_to(p_arr[:, None, :], (B, N, 2))

    def mm(a, b):
        return jnp.dot(a, b, precision=lax.Precision.HIGHEST)

    enc = params["set_encoder"]
    x = jnp.concatenate([coords, p_full, amps], axis=-1)              # [B,N,11]
    w0 = jnp.concatenate([enc["w0c"], enc["w0p"], enc["w0a"]], axis=0)
    h = jnp.maximum(mm(x, w0) + enc["b0"], 0.0)
    h = jnp.maximum(mm(h, enc["w1"]) + enc["b1"], 0.0)
    h = jnp.maximum(mm(h, enc["w2"]) + enc["b2"], 0.0)
    h = mm(h, enc["w3"]) + enc["b3"]
    z = jnp.mean(h, axis=1)                                           # [B,40]

    def run_head(w0h, b0h, w1h, b1h, w2h, b2h):
        g = jnp.maximum(mm(z, w0h) + b0h, 0.0)
        g = jnp.maximum(mm(g, w1h) + b1h, 0.0)
        return mm(g, w2h) + b2h

    w_io = [None] * NUM_HYPO_LAYERS
    b_gen = [None] * NUM_HYPO_LAYERS
    hb = params["hyper_big"]
    for bi, l in enumerate(BIG_LAYERS):
        fi, fo = HYPO_LAYER_DIMS[l]
        raw = run_head(hb["w0"][bi], hb["b0"][bi], hb["w1"][bi], hb["b1"][bi],
                       hb["w2"][bi][:, :fi * fo], hb["b2"][bi][:, :fi * fo])
        w_io[l] = raw.reshape(B, fi, fo)
    hs = params["hyper_small"]
    for i, (kind, l, od, _pad, off) in enumerate(SMALL_HEADS):
        fi, fo = HYPO_LAYER_DIMS[l]
        sl = slice(i * HYPER_HID, (i + 1) * HYPER_HID)
        raw = run_head(hs["w0"][:, sl], hs["b0"][:, sl], hs["w1"][i], hs["b1"][i],
                       hs["w2"][:, off:off + od], hs["b2"][:, off:off + od])
        if kind == "weight":
            w_io[l] = raw.reshape(B, fi, fo)
        else:
            b_gen[l] = raw

    h = coords
    for l in range(NUM_HYPO_LAYERS):
        h = jnp.einsum("bnd,bdo->bno", h, w_io[l],
                       precision=lax.Precision.HIGHEST) + b_gen[l][:, None, :]
        if l < NUM_HYPO_LAYERS - 1:
            h = jnp.maximum(h, 0.0)
    return {"model_out": h, "latent_vec": z, "w_io": w_io, "b_gen": b_gen}


# ----------------------------------- main -------------------------------------
if __name__ == "__main__":
    key = jax.random.PRNGKey(0)
    kp, kc, ka, kpar = jax.random.split(key, 4)

    params = init_model_params(kp)

    B, N = 2, 8
    coords = jax.random.normal(kc, (B, N, 6), jnp.float32)
    amps = jax.random.normal(ka, (B, N, 3), jnp.float32)
    mat_params = jax.random.normal(kpar, (2,), jnp.float32)   # (thickness, doping)

    out = hyper_brdf_forward(params, coords, amps, mat_params)
    jax.block_until_ready(out["model_out"])
    jax.block_until_ready(out["latent_vec"])

    assert out["model_out"].shape == (B, N, HYPO_OUT)
    assert out["latent_vec"].shape == (B, LATENT)
    assert out["hypo_params"]["net.net.1.0.weight"].shape == (B, HYPO_HID, HYPO_HID)
    assert out["hypo_params"]["net.net.4.0.bias"].shape == (B, HYPO_OUT)

    # correctness vs. pure-JAX reference (same params)
    ref = _reference_forward(params, coords, amps, mat_params)
    np.testing.assert_allclose(np.asarray(out["latent_vec"]),
                               np.asarray(ref["latent_vec"]), rtol=1e-2, atol=1e-5)
    np.testing.assert_allclose(np.asarray(out["model_out"]),
                               np.asarray(ref["model_out"]), rtol=1e-2, atol=1e-5)
    np.testing.assert_allclose(np.asarray(out["hypo_params"]["net.net.2.0.weight"]),
                               np.asarray(jnp.swapaxes(ref["w_io"][2], -1, -2)),
                               rtol=1e-2, atol=1e-5)

    # also exercise the per-sample material-params path ([B, N, 2])
    p3 = jax.random.normal(kpar, (B, N, 2), jnp.float32)
    out3 = hyper_brdf_forward(params, coords, amps, p3)
    jax.block_until_ready(out3["model_out"])
    ref3 = _reference_forward(params, coords, amps, p3)
    np.testing.assert_allclose(np.asarray(out3["model_out"]),
                               np.asarray(ref3["model_out"]), rtol=1e-2, atol=1e-5)

    print("KERNEL_OK")
</pallas_src>

<mosaic_0001>
module attributes {stable_mosaic.version = 11 : i64} {
  func.func @set_encoder_kernel(%arg0: i32, %arg1: i32, %arg2: memref<1x8x6xf32, #tpu.memory_space<vmem>>, %arg3: memref<1x8x3xf32, #tpu.memory_space<vmem>>, %arg4: memref<2x2xf32, #tpu.memory_space<smem>>, %arg5: memref<6x128xf32, #tpu.memory_space<vmem>>, %arg6: memref<2x128xf32, #tpu.memory_space<vmem>>, %arg7: memref<3x128xf32, #tpu.memory_space<vmem>>, %arg8: memref<1x128xf32, #tpu.memory_space<vmem>>, %arg9: memref<128x128xf32, #tpu.memory_space<vmem>>, %arg10: memref<1x128xf32, #tpu.memory_space<vmem>>, %arg11: memref<128x128xf32, #tpu.memory_space<vmem>>, %arg12: memref<1x128xf32, #tpu.memory_space<vmem>>, %arg13: memref<128x40xf32, #tpu.memory_space<vmem>>, %arg14: memref<1x40xf32, #tpu.memory_space<vmem>>, %arg15: memref<1x1x40xf32, #tpu.memory_space<vmem>>, %arg16: memref<1x40xf32, #tpu.memory_space<vmem>>) attributes {dimension_semantics = [#tpu.dimension_semantics<parallel>, #tpu.dimension_semantics<arbitrary>], iteration_bounds = array<i64: 2, 1>, scalar_prefetch = 0 : i64, scratch_operands = 1 : i64, tpu.core_type = #tpu.core_type<tc>, window_params = [{transform_indices = @transform_0, window_bounds = array<i64: 1, 8, 6>}, {transform_indices = @transform_1, window_bounds = array<i64: 1, 8, 3>}, {transform_indices = @transform_2, window_bounds = array<i64: 2, 2>}, {pipeline_mode = #tpu.pipeline_mode<synchronous>, transform_indices = @transform_3, window_bounds = array<i64: 6, 128>}, {pipeline_mode = #tpu.pipeline_mode<synchronous>, transform_indices = @transform_4, window_bounds = array<i64: 2, 128>}, {pipeline_mode = #tpu.pipeline_mode<synchronous>, transform_indices = @transform_5, window_bounds = array<i64: 3, 128>}, {pipeline_mode = #tpu.pipeline_mode<synchronous>, transform_indices = @transform_6, window_bounds = array<i64: 1, 128>}, {pipeline_mode = #tpu.pipeline_mode<synchronous>, transform_indices = @transform_7, window_bounds = array<i64: 128, 128>}, {pipeline_mode = #tpu.pipeline_mode<synchronous>, transform_indices = @transform_8, window_bounds = array<i64: 1, 128>}, {pipeline_mode = #tpu.pipeline_mode<synchronous>, transform_indices = @transform_9, window_bounds = array<i64: 128, 128>}, {pipeline_mode = #tpu.pipeline_mode<synchronous>, transform_indices = @transform_10, window_bounds = array<i64: 1, 128>}, {pipeline_mode = #tpu.pipeline_mode<synchronous>, transform_indices = @transform_11, window_bounds = array<i64: 128, 40>}, {pipeline_mode = #tpu.pipeline_mode<synchronous>, transform_indices = @transform_12, window_bounds = array<i64: 1, 40>}, {transform_indices = @transform_13, window_bounds = array<i64: 1, 1, 40>}]} {
    %c0_i32 = arith.constant 0 : i32
    %0 = arith.cmpi eq, %arg1, %c0_i32 : i32
    %1 = arith.extui %0 : i1 to i32
    %c0_i32_0 = arith.constant 0 : i32
    %2 = arith.cmpi ne, %1, %c0_i32_0 : i32
    scf.if %2 {
      %cst_45 = arith.constant 0.000000e+00 : f32
      %65 = vector.broadcast %cst_45 : f32 to vector<1x40xf32>
      %c0_46 = arith.constant 0 : index
      %c0_47 = arith.constant 0 : index
      %66 = vector.load %arg16[%c0_46, %c0_47] : memref<1x40xf32, #tpu.memory_space<vmem>>, vector<1x40xf32>
      tpu.vector_store %arg16[%c0_46, %c0_47], %65 {strides = array<i32>} : memref<1x40xf32, #tpu.memory_space<vmem>>, vector<1x40xf32>,
    } else {
    }
    %c0 = arith.constant 0 : index
    %c0_1 = arith.constant 0 : index
    %c0_2 = arith.constant 0 : index
    %3 = vector.load %arg2[%c0, %c0_1, %c0_2] : memref<1x8x6xf32, #tpu.memory_space<vmem>>, vector<1x8x6xf32>
    %4 = vector.shape_cast %3 : vector<1x8x6xf32> to vector<8x6xf32>
    %c0_3 = arith.constant 0 : index
    %c0_4 = arith.constant 0 : index
    %c0_5 = arith.constant 0 : index
    %5 = vector.load %arg3[%c0_3, %c0_4, %c0_5] : memref<1x8x3xf32, #tpu.memory_space<vmem>>, vector<1x8x3xf32>
    %6 = vector.shape_cast %5 : vector<1x8x3xf32> to vector<8x3xf32>
    %c0_6 = arith.constant 0 : index
    %c0_7 = arith.constant 0 : index
    %7 = vector.load %arg5[%c0_6, %c0_7] : memref<6x128xf32, #tpu.memory_space<vmem>>, vector<6x128xf32>
    %cst = arith.constant dense<0.000000e+00> : vector<8x128xf32>
    %8 = tpu.matmul %4, %7, %cst {dimension_numbers = #tpu.dot_dimension_numbers<[1], [0], [0], [1], [0, 0, 1, 1], [], []>} : vector<8x6xf32>, vector<6x128xf32>, vector<8x128xf32> -> vector<8x128xf32>
    %c0_8 = arith.constant 0 : index
    %c0_9 = arith.constant 0 : index
    %9 = vector.load %arg7[%c0_8, %c0_9] : memref<3x128xf32, #tpu.memory_space<vmem>>, vector<3x128xf32>
    %cst_10 = arith.constant dense<0.000000e+00> : vector<8x128xf32>
    %10 = tpu.matmul %6, %9, %cst_10 {dimension_numbers = #tpu.dot_dimension_numbers<[1], [0], [0], [1], [0, 0, 1, 1], [], []>} : vector<8x3xf32>, vector<3x128xf32>, vector<8x128xf32> -> vector<8x128xf32>
    %11 = arith.addf %8, %10 : vector<8x128xf32>
    %12 = arith.index_cast %arg0 : i32 to index
    %c0_11 = arith.constant 0 : index
    %13 = memref.load %arg4[%12, %c0_11] : memref<2x2xf32, #tpu.memory_space<smem>>
    %c0_12 = arith.constant 0 : index
    %c0_13 = arith.constant 0 : index
    %14 = vector.load %arg6[%c0_12, %c0_13] : memref<2x128xf32, #tpu.memory_space<vmem>>, vector<1x128xf32>
    %15 = vector.broadcast %13 : f32 to vector<1x128xf32>
    %16 = arith.mulf %15, %14 : vector<1x128xf32>
    %17 = arith.index_cast %arg0 : i32 to index
    %c1 = arith.constant 1 : index
    %18 = memref.load %arg4[%17, %c1] : memref<2x2xf32, #tpu.memory_space<smem>>
    %c1_14 = arith.constant 1 : index
    %c0_15 = arith.constant 0 : index
    %19 = vector.load %arg6[%c1_14, %c0_15] : memref<2x128xf32, #tpu.memory_space<vmem>>, vector<1x128xf32>
    %20 = vector.broadcast %18 : f32 to vector<1x128xf32>
    %21 = arith.mulf %20, %19 : vector<1x128xf32>
    %22 = arith.addf %16, %21 : vector<1x128xf32>
    %23 = vector.broadcast %22 : vector<1x128xf32> to vector<8x128xf32>
    %24 = arith.addf %11, %23 : vector<8x128xf32>
    %c0_16 = arith.constant 0 : index
    %c0_17 = arith.constant 0 : index
    %25 = vector.load %arg8[%c0_16, %c0_17] : memref<1x128xf32, #tpu.memory_space<vmem>>, vector<1x128xf32>
    %26 = vector.broadcast %25 : vector<1x128xf32> to vector<8x128xf32>
    %27 = arith.addf %24, %26 : vector<8x128xf32>
    %cst_18 = arith.constant 0.000000e+00 : f32
    %28 = vector.broadcast %cst_18 : f32 to vector<8x128xf32>
    %29 = arith.maximumf %27, %28 : vector<8x128xf32>
    %c0_19 = arith.constant 0 : index
    %c0_20 = arith.constant 0 : index
    %30 = vector.load %arg9[%c0_19, %c0_20] : memref<128x128xf32, #tpu.memory_space<vmem>>, vector<128x128xf32>
    %cst_21 = arith.constant dense<0.000000e+00> : vector<8x128xf32>
    %31 = tpu.matmul %29, %30, %cst_21 {dimension_numbers = #tpu.dot_dimension_numbers<[1], [0], [0], [1], [0, 0, 1, 1], [], []>} : vector<8x128xf32>, vector<128x128xf32>, vector<8x128xf32> -> vector<8x128xf32>
    %c0_22 = arith.constant 0 : index
    %c0_23 = arith.constant 0 : index
    %32 = vector.load %arg10[%c0_22, %c0_23] : memref<1x128xf32, #tpu.memory_space<vmem>>, vector<1x128xf32>
    %33 = vector.broadcast %32 : vector<1x128xf32> to vector<8x128xf32>
    %34 = arith.addf %31, %33 : vector<8x128xf32>
    %cst_24 = arith.constant 0.000000e+00 : f32
    %35 = vector.broadcast %cst_24 : f32 to vector<8x128xf32>
    %36 = arith.maximumf %34, %35 : vector<8x128xf32>
    %c0_25 = arith.constant 0 : index
    %c0_26 = arith.constant 0 : index
    %37 = vector.load %arg11[%c0_25, %c0_26] : memref<128x128xf32, #tpu.memory_space<vmem>>, vector<128x128xf32>
    %cst_27 = arith.constant dense<0.000000e+00> : vector<8x128xf32>
    %38 = tpu.matmul %36, %37, %cst_27 {dimension_numbers = #tpu.dot_dimension_numbers<[1], [0], [0], [1], [0, 0, 1, 1], [], []>} : vector<8x128xf32>, vector<128x128xf32>, vector<8x128xf32> -> vector<8x128xf32>
    %c0_28 = arith.constant 0 : index
    %c0_29 = arith.constant 0 : index
    %39 = vector.load %arg12[%c0_28, %c0_29] : memref<1x128xf32, #tpu.memory_space<vmem>>, vector<1x128xf32>
    %40 = vector.broadcast %39 : vector<1x128xf32> to vector<8x128xf32>
    %41 = arith.addf %38, %40 : vector<8x128xf32>
    %cst_30 = arith.constant 0.000000e+00 : f32
    %42 = vector.broadcast %cst_30 : f32 to vector<8x128xf32>
    %43 = arith.maximumf %41, %42 : vector<8x128xf32>
    %c0_31 = arith.constant 0 : index
    %c0_32 = arith.constant 0 : index
    %44 = vector.load %arg13[%c0_31, %c0_32] : memref<128x40xf32, #tpu.memory_space<vmem>>, vector<128x40xf32>
    %cst_33 = arith.constant dense<0.000000e+00> : vector<8x40xf32>
    %45 = tpu.matmul %43, %44, %cst_33 {dimension_numbers = #tpu.dot_dimension_numbers<[1], [0], [0], [1], [0, 0, 1, 1], [], []>} : vector<8x128xf32>, vector<128x40xf32>, vector<8x40xf32> -> vector<8x40xf32>
    %c0_34 = arith.constant 0 : index
    %c0_35 = arith.constant 0 : index
    %46 = vector.load %arg14[%c0_34, %c0_35] : memref<1x40xf32, #tpu.memory_space<vmem>>, vector<1x40xf32>
    %47 = vector.broadcast %46 : vector<1x40xf32> to vector<8x40xf32>
    %48 = arith.addf %45, %47 : vector<8x40xf32>
    %c8_i32 = arith.constant 8 : i32
    %49 = arith.muli %arg1, %c8_i32 : i32
    %50 = tpu.iota {dimensions = array<i32: 0>} : vector<8x40xi32>
    %51 = vector.broadcast %49 : i32 to vector<8x40xi32>
    %52 = arith.addi %51, %50 : vector<8x40xi32>
    %c8_i32_36 = arith.constant 8 : i32
    %53 = vector.broadcast %c8_i32_36 : i32 to vector<8x40xi32>
    %54 = arith.cmpi slt, %52, %53 : vector<8x40xi32>
    %cst_37 = arith.constant 0.000000e+00 : f32
    %55 = vector.broadcast %cst_37 : f32 to vector<8x40xf32>
    %56 = arith.select %54, %48, %55 : vector<8x40xi1>, vector<8x40xf32>
    %c0_38 = arith.constant 0 : index
    %c0_39 = arith.constant 0 : index
    %57 = vector.load %arg16[%c0_38, %c0_39] : memref<1x40xf32, #tpu.memory_space<vmem>>, vector<1x40xf32>
    %cst_40 = arith.constant dense<0.000000e+00> : vector<40xf32>
    %58 = vector.multi_reduction <add>, %56, %cst_40 [0] : vector<8x40xf32> to vector<40xf32>
    %59 = vector.shape_cast %58 : vector<40xf32> to vector<1x40xf32>
    %60 = arith.addf %57, %59 : vector<1x40xf32>
    %c0_41 = arith.constant 0 : index
    %c0_42 = arith.constant 0 : index
    %61 = vector.load %arg16[%c0_41, %c0_42] : memref<1x40xf32, #tpu.memory_space<vmem>>, vector<1x40xf32>
    tpu.vector_store %arg16[%c0_41, %c0_42], %60 {strides = array<i32>} : memref<1x40xf32, #tpu.memory_space<vmem>>, vector<1x40xf32>,
    %c0_i32_43 = arith.constant 0 : i32
    %62 = arith.cmpi eq, %arg1, %c0_i32_43 : i32
    %63 = arith.extui %62 : i1 to i32
    %c0_i32_44 = arith.constant 0 : i32
    %64 = arith.cmpi ne, %63, %c0_i32_44 : i32
    scf.if %64 {
      %c0_45 = arith.constant 0 : index
      %c0_46 = arith.constant 0 : index
      %65 = vector.load %arg16[%c0_45, %c0_46] : memref<1x40xf32, #tpu.memory_space<vmem>>, vector<1x40xf32>
      %cst_47 = arith.constant 1.250000e-01 : f32
      %66 = vector.broadcast %cst_47 : f32 to vector<1x40xf32>
      %67 = arith.mulf %65, %66 : vector<1x40xf32>
      %c0_48 = arith.constant 0 : index
      %c0_49 = arith.constant 0 : index
      %c0_50 = arith.constant 0 : index
      %68 = vector.load %arg15[%c0_48, %c0_49, %c0_50] : memref<1x1x40xf32, #tpu.memory_space<vmem>>, vector<1x1x40xf32>
      %69 = vector.shape_cast %68 : vector<1x1x40xf32> to vector<1x40xf32>
      %70 = vector.shape_cast %67 : vector<1x40xf32> to vector<1x1x40xf32>
      tpu.vector_store %arg15[%c0_48, %c0_49, %c0_50], %70 {strides = array<i32>} : memref<1x1x40xf32, #tpu.memory_space<vmem>>, vector<1x1x40xf32>,
    } else {
    }
    return
  }
  func.func @transform_0(%arg0: i32, %arg1: i32) -> (i32, i32, i32) {
    %c0_i32 = arith.constant 0 : i32
    %c0_i32_0 = arith.constant 0 : i32
    return %arg0, %arg1, %c0_i32 : i32, i32, i32
  }
  func.func @transform_1(%arg0: i32, %arg1: i32) -> (i32, i32, i32) {
    %c0_i32 = arith.constant 0 : i32
    %c0_i32_0 = arith.constant 0 : i32
    return %arg0, %arg1, %c0_i32 : i32, i32, i32
  }
  func.func @transform_2(%arg0: i32, %arg1: i32) -> (i32, i32) {
    %c0_i32 = arith.constant 0 : i32
    %c0_i32_0 = arith.constant 0 : i32
    %c0_i32_1 = arith.constant 0 : i32
    return %c0_i32, %c0_i32_0 : i32, i32
  }
  func.func @transform_3(%arg0: i32, %arg1: i32) -> (i32, i32) {
    %c0_i32 = arith.constant 0 : i32
    %c0_i32_0 = arith.constant 0 : i32
    %c0_i32_1 = arith.constant 0 : i32
    return %c0_i32, %c0_i32_0 : i32, i32
  }
  func.func @transform_4(%arg0: i32, %arg1: i32) -> (i32, i32) {
    %c0_i32 = arith.constant 0 : i32
    %c0_i32_0 = arith.constant 0 : i32
    %c0_i32_1 = arith.constant 0 : i32
    return %c0_i32, %c0_i32_0 : i32, i32
  }
  func.func @transform_5(%arg0: i32, %arg1: i32) -> (i32, i32) {
    %c0_i32 = arith.constant 0 : i32
    %c0_i32_0 = arith.constant 0 : i32
    %c0_i32_1 = arith.constant 0 : i32
    return %c0_i32, %c0_i32_0 : i32, i32
  }
  func.func @transform_6(%arg0: i32, %arg1: i32) -> (i32, i32) {
    %c0_i32 = arith.constant 0 : i32
    %c0_i32_0 = arith.constant 0 : i32
    %c0_i32_1 = arith.constant 0 : i32
    return %c0_i32, %c0_i32_0 : i32, i32
  }
  func.func @transform_7(%arg0: i32, %arg1: i32) -> (i32, i32) {
    %c0_i32 = arith.constant 0 : i32
    %c0_i32_0 = arith.constant 0 : i32
    %c0_i32_1 = arith.constant 0 : i32
    return %c0_i32, %c0_i32_0 : i32, i32
  }
  func.func @transform_8(%arg0: i32, %arg1: i32) -> (i32, i32) {
    %c0_i32 = arith.constant 0 : i32
    %c0_i32_0 = arith.constant 0 : i32
    %c0_i32_1 = arith.constant 0 : i32
    return %c0_i32, %c0_i32_0 : i32, i32
  }
  func.func @transform_9(%arg0: i32, %arg1: i32) -> (i32, i32) {
    %c0_i32 = arith.constant 0 : i32
    %c0_i32_0 = arith.constant 0 : i32
    %c0_i32_1 = arith.constant 0 : i32
    return %c0_i32, %c0_i32_0 : i32, i32
  }
  func.func @transform_10(%arg0: i32, %arg1: i32) -> (i32, i32) {
    %c0_i32 = arith.constant 0 : i32
    %c0_i32_0 = arith.constant 0 : i32
    %c0_i32_1 = arith.constant 0 : i32
    return %c0_i32, %c0_i32_0 : i32, i32
  }
  func.func @transform_11(%arg0: i32, %arg1: i32) -> (i32, i32) {
    %c0_i32 = arith.constant 0 : i32
    %c0_i32_0 = arith.constant 0 : i32
    %c0_i32_1 = arith.constant 0 : i32
    return %c0_i32, %c0_i32_0 : i32, i32
  }
  func.func @transform_12(%arg0: i32, %arg1: i32) -> (i32, i32) {
    %c0_i32 = arith.constant 0 : i32
    %c0_i32_0 = arith.constant 0 : i32
    %c0_i32_1 = arith.constant 0 : i32
    return %c0_i32, %c0_i32_0 : i32, i32
  }
  func.func @transform_13(%arg0: i32, %arg1: i32) -> (i32, i32, i32) {
    %c0_i32 = arith.constant 0 : i32
    %c0_i32_0 = arith.constant 0 : i32
    %c0_i32_1 = arith.constant 0 : i32
    return %arg0, %c0_i32, %c0_i32_0 : i32, i32, i32
  }
}

</mosaic_0001>

<llo_original>
// kernel: tpu_custom_call.1
$region0: #{tpu_custom_call.1}
  #allocation0 [shape = 'u32[]', space=smem, size = 0x4, offset = 0x4, fixed_abs, tag = 'smem constant byte address 0x4 - core index']
  #allocation1 [shape = 'u32[144,128]{1,0:T(1,128)}', space=vmem, size = 0x12000, scoped, tag = 'internal scratch']
  #allocation2 [shape = 'f32[1,40]{1,0:T(1,128)}', space=vmem, size = 0x200, scoped, tag = 'scratch operand']
  %s0 = inlined_call_operand.vmem [shape: f32[2,8,6], index: 0, kind: input, shape index: {}]
  %s1 = inlined_call_operand.vmem [shape: f32[2,8,3], index: 1, kind: input, shape index: {}]
  %s2 = inlined_call_operand.vmem [shape: f32[2,2], index: 2, kind: input, shape index: {}]
  %s3 = inlined_call_operand.vmem [shape: f32[6,128], index: 3, kind: input, shape index: {}]
  %s4 = inlined_call_operand.vmem [shape: f32[2,128], index: 4, kind: input, shape index: {}]
  %s5 = inlined_call_operand.vmem [shape: f32[3,128], index: 5, kind: input, shape index: {}]
  %s6 = inlined_call_operand.vmem [shape: f32[1,128], index: 6, kind: input, shape index: {}]
  %s7 = inlined_call_operand.vmem [shape: f32[128,128], index: 7, kind: input, shape index: {}]
  %s8 = inlined_call_operand.vmem [shape: f32[1,128], index: 8, kind: input, shape index: {}]
  %s9 = inlined_call_operand.hbm [shape: f32[128,128], index: 9, kind: input, shape index: {}]
  %s10 = inlined_call_operand.vmem [shape: f32[1,128], index: 10, kind: input, shape index: {}]
  %s11 = inlined_call_operand.vmem [shape: f32[128,40], index: 11, kind: input, shape index: {}]
  %s12 = inlined_call_operand.vmem [shape: f32[1,40], index: 12, kind: input, shape index: {}]
  %s13 = inlined_call_operand.hbm [shape: f32[2,1,40], index: 13, kind: output, shape index: {}]
  %s14 = sld [smem:[#allocation0]]
  $region101: #{tpu_custom_call.1} parent=0
    _
  %s16 = ssub.s32 1, %s14
  %s17 = scalar_select 0, %s16, %s14
  $region1: #{tpu_custom_call.1} parent=0
    #allocation3 [shape = 'u8[1024]{0}', space=smem, size = 0x400, scoped, tag = 'input window, operand 2, single buffered']
    #allocation4 [shape = 's32[2]{0}', space=sflag, size = 0x8, scoped, tag = 'scoped memory for tpu_custom_call.1']
    #allocation5 [shape = 's32[2]{0}', space=sflag, size = 0x8, scoped, tag = 'scoped memory for tpu_custom_call.1']
    #allocation6 [shape = 's32[2]{0}', space=sflag, size = 0x8, scoped, tag = 'scoped memory for tpu_custom_call.1']
    #allocation7 [shape = 'u8[65536]{0}', space=vmem, size = 0x10000, scoped, tag = 'input window, operand 9, single buffered']
    #allocation8 [shape = 'u8[1024]{0}', space=vmem, size = 0x400, scoped, tag = 'output window, operand 0']
    %18 = vsyncpa [#allocation6], 0
    %19 = vsyncpa [#allocation4], 0
    %20 = vsyncpa [#allocation5], 0
    %s21 = scalar_lea.sflag [#allocation5], 1
    %22 = vsyncpa %s21, 0
    loop: start=0, step=1, limit=4
    $region2: #{tpu_custom_call.1} parent=1 // loop_pre_header
      _
    $region3: #{tpu_custom_call.1} parent=1 // loop_header
      %s24 = sphi 0, %s28
      %p25 = scmp.ge.s32.totalorder %s24, 4
      %s31 = sphi 0, %s43
      %s32 = sphi 0, %s39
      %s33 = sphi 0, %s31
      %s34 = sphi 0, %s32
      %s35 = sphi 0, %s33
      %s36 = sphi 0, %s34
      %s48 = sphi 0, %s50
      %s51 = sphi 0, %s48
      %s52 = sphi 0, %s51
      %s68 = sphi 0, %s52
      %s76 = sphi 0, %s78
      %s79 = sphi 0, %s76
      %s80 = sphi 0, %s79
      %s96 = sphi 0, %s80
      %s100 = sphi 0, %s100
      %s102 = sphi 0, %s100
      %s103 = sphi 0, %s102
      %s117 = sphi 0, %s103
      %s121 = sphi 0, %s121
      %s123 = sphi 0, %s121
      %s124 = sphi 0, %s123
      %s138 = sphi 0, %s124
      %s142 = sphi 0, %s142
      %s144 = sphi 0, %s142
      %s145 = sphi 0, %s144
      %s159 = sphi 0, %s145
      %s163 = sphi 0, %s163
      %s165 = sphi 0, %s163
      %s166 = sphi 0, %s165
      %s180 = sphi 0, %s166
      %s184 = sphi 0, %s184
      %s186 = sphi 0, %s184
      %s187 = sphi 0, %s186
      %s201 = sphi 0, %s187
      %s205 = sphi 0, %s205
      %s207 = sphi 0, %s205
      %s208 = sphi 0, %s207
      %s222 = sphi 0, %s208
      %s226 = sphi 0, %s226
      %s228 = sphi 0, %s226
      %s229 = sphi 0, %s228
      %s243 = sphi 0, %s229
      %s247 = sphi 0, %s247
      %s249 = sphi 0, %s247
      %s250 = sphi 0, %s249
      %s264 = sphi 0, %s250
      %s268 = sphi 0, %s268
      %s270 = sphi 0, %s268
      %s271 = sphi 0, %s270
      %s285 = sphi 0, %s271
      %s289 = sphi 0, %s289
      %s291 = sphi 0, %s289
      %s292 = sphi 0, %s291
      %s306 = sphi 0, %s292
      %s310 = sphi 0, %s310
      %s312 = sphi 0, %s310
      %s313 = sphi 0, %s312
      %s327 = sphi 0, %s313
      %s333 = sphi 0, %s335
      %s336 = sphi 0, %s333
      %s337 = sphi 0, %s336
      %s353 = sphi 0, %s337
    $region4: #{tpu_custom_call.1} parent=1 // loop_header_branch
      %27 = sbr.rel (%p25) target = $region8
    $region5: #{tpu_custom_call.1} parent=1 // loop_body
      %s29 = ssub.s32 %s24, 1
      %s30 = ssub.s32 %s24, 2
      %s37 = sadd.s32 1, %s32
      %p38 = scmp.ge.s32.totalorder %s37, 1
      %s39 = scalar_select %p38, 0, %s37
      %s40 = sadd.s32 1, %s31
      %s41 = scalar_select %p38, %s40, %s31
      %p42 = scmp.ge.s32.totalorder %s41, 2
      %s43 = scalar_select %p42, 0, %s41
      %s44 = ssub.s32 %s31, %s43
      %s45 = ssub.s32 %s32, %s39
      %s46 = sor.u32 %s44, %s45
      %p47 = scmp.eq.s32.totalorder %s46, 0
      %s49 = sadd.s32 %s48, 1
      %s50 = scalar_select %p47, %s48, %s49
      %p53 = pneg %p47
      %p54 = scmp.eq.s32.totalorder %s24, 1
      %p55 = por %p53, %p54
      %p56 = scmp.ne.s32.totalorder %s48, %s51
      %p57 = scmp.eq.s32.totalorder %s24, 0
      %p58 = por %p56, %p57
      %p59 = scmp.ne.s32.totalorder %s48, %s51
      %p60 = scmp.eq.s32.totalorder %s29, 1
      %p61 = por %p59, %p60
      %p62 = scmp.ne.s32.totalorder %s51, %s52
      %p63 = scmp.eq.s32.totalorder %s29, 0
      %p64 = por %p62, %p63
      %p65 = scmp.ne.s32.totalorder %s51, %s52
      %p66 = scmp.eq.s32.totalorder %s30, 1
      %p67 = por %p65, %p66
      %p69 = scmp.ne.s32.totalorder %s52, %s68
      %p70 = scmp.eq.s32.totalorder %s30, 0
      %p71 = por %p69, %p70
      %s72 = ssub.s32 %s31, %s43
      %s73 = ssub.s32 %s32, %s39
      %s74 = sor.u32 %s72, %s73
      %p75 = scmp.eq.s32.totalorder %s74, 0
      %s77 = sadd.s32 %s76, 1
      %s78 = scalar_select %p75, %s76, %s77
      %p81 = pneg %p75
      %p82 = scmp.eq.s32.totalorder %s24, 1
      %p83 = por %p81, %p82
      %p84 = scmp.ne.s32.totalorder %s76, %s79
      %p85 = scmp.eq.s32.totalorder %s24, 0
      %p86 = por %p84, %p85
      %p87 = scmp.ne.s32.totalorder %s76, %s79
      %p88 = scmp.eq.s32.totalorder %s29, 1
      %p89 = por %p87, %p88
      %p90 = scmp.ne.s32.totalorder %s79, %s80
      %p91 = scmp.eq.s32.totalorder %s29, 0
      %p92 = por %p90, %p91
      %p93 = scmp.ne.s32.totalorder %s79, %s80
      %p94 = scmp.eq.s32.totalorder %s30, 1
      %p95 = por %p93, %p94
      %p97 = scmp.ne.s32.totalorder %s80, %s96
      %p98 = scmp.eq.s32.totalorder %s30, 0
      %p99 = por %p97, %p98
      %s101 = sadd.s32 %s100, 1
      %p104 = scmp.eq.s32.totalorder %s24, 1
      %p105 = scmp.ne.s32.totalorder %s100, %s102
      %p106 = scmp.eq.s32.totalorder %s24, 0
      %p107 = por %p105, %p106
      %p108 = scmp.ne.s32.totalorder %s100, %s102
      %p109 = scmp.eq.s32.totalorder %s29, 1
      %p110 = por %p108, %p109
      %p111 = scmp.ne.s32.totalorder %s102, %s103
      %p112 = scmp.eq.s32.totalorder %s29, 0
      %p113 = por %p111, %p112
      %p114 = scmp.ne.s32.totalorder %s102, %s103
      %p115 = scmp.eq.s32.totalorder %s30, 1
      %p116 = por %p114, %p115
      %p118 = scmp.ne.s32.totalorder %s103, %s117
      %p119 = scmp.eq.s32.totalorder %s30, 0
      %p120 = por %p118, %p119
      %s122 = sadd.s32 %s121, 1
      %p125 = scmp.eq.s32.totalorder %s24, 1
      %p126 = scmp.ne.s32.totalorder %s121, %s123
      %p127 = scmp.eq.s32.totalorder %s24, 0
      %p128 = por %p126, %p127
      %p129 = scmp.ne.s32.totalorder %s121, %s123
      %p130 = scmp.eq.s32.totalorder %s29, 1
      %p131 = por %p129, %p130
      %p132 = scmp.ne.s32.totalorder %s123, %s124
      %p133 = scmp.eq.s32.totalorder %s29, 0
      %p134 = por %p132, %p133
      %p135 = scmp.ne.s32.totalorder %s123, %s124
      %p136 = scmp.eq.s32.totalorder %s30, 1
      %p137 = por %p135, %p136
      %p139 = scmp.ne.s32.totalorder %s124, %s138
      %p140 = scmp.eq.s32.totalorder %s30, 0
      %p141 = por %p139, %p140
      %s143 = sadd.s32 %s142, 1
      %p146 = scmp.eq.s32.totalorder %s24, 1
      %p147 = scmp.ne.s32.totalorder %s142, %s144
      %p148 = scmp.eq.s32.totalorder %s24, 0
      %p149 = por %p147, %p148
      %p150 = scmp.ne.s32.totalorder %s142, %s144
      %p151 = scmp.eq.s32.totalorder %s29, 1
      %p152 = por %p150, %p151
      %p153 = scmp.ne.s32.totalorder %s144, %s145
      %p154 = scmp.eq.s32.totalorder %s29, 0
      %p155 = por %p153, %p154
      %p156 = scmp.ne.s32.totalorder %s144, %s145
      %p157 = scmp.eq.s32.totalorder %s30, 1
      %p158 = por %p156, %p157
      %p160 = scmp.ne.s32.totalorder %s145, %s159
      %p161 = scmp.eq.s32.totalorder %s30, 0
      %p162 = por %p160, %p161
      %s164 = sadd.s32 %s163, 1
      %p167 = scmp.eq.s32.totalorder %s24, 1
      %p168 = scmp.ne.s32.totalorder %s163, %s165
      %p169 = scmp.eq.s32.totalorder %s24, 0
      %p170 = por %p168, %p169
      %p171 = scmp.ne.s32.totalorder %s163, %s165
      %p172 = scmp.eq.s32.totalorder %s29, 1
      %p173 = por %p171, %p172
      %p174 = scmp.ne.s32.totalorder %s165, %s166
      %p175 = scmp.eq.s32.totalorder %s29, 0
      %p176 = por %p174, %p175
      %p177 = scmp.ne.s32.totalorder %s165, %s166
      %p178 = scmp.eq.s32.totalorder %s30, 1
      %p179 = por %p177, %p178
      %p181 = scmp.ne.s32.totalorder %s166, %s180
      %p182 = scmp.eq.s32.totalorder %s30, 0
      %p183 = por %p181, %p182
      %s185 = sadd.s32 %s184, 1
      %p188 = scmp.eq.s32.totalorder %s24, 1
      %p189 = scmp.ne.s32.totalorder %s184, %s186
      %p190 = scmp.eq.s32.totalorder %s24, 0
      %p191 = por %p189, %p190
      %p192 = scmp.ne.s32.totalorder %s184, %s186
      %p193 = scmp.eq.s32.totalorder %s29, 1
      %p194 = por %p192, %p193
      %p195 = scmp.ne.s32.totalorder %s186, %s187
      %p196 = scmp.eq.s32.totalorder %s29, 0
      %p197 = por %p195, %p196
      %p198 = scmp.ne.s32.totalorder %s186, %s187
      %p199 = scmp.eq.s32.totalorder %s30, 1
      %p200 = por %p198, %p199
      %p202 = scmp.ne.s32.totalorder %s187, %s201
      %p203 = scmp.eq.s32.totalorder %s30, 0
      %p204 = por %p202, %p203
      %s206 = sadd.s32 %s205, 1
      %p209 = scmp.eq.s32.totalorder %s24, 1
      %p210 = scmp.ne.s32.totalorder %s205, %s207
      %p211 = scmp.eq.s32.totalorder %s24, 0
      %p212 = por %p210, %p211
      %p213 = scmp.ne.s32.totalorder %s205, %s207
      %p214 = scmp.eq.s32.totalorder %s29, 1
      %p215 = por %p213, %p214
      %p216 = scmp.ne.s32.totalorder %s207, %s208
      %p217 = scmp.eq.s32.totalorder %s29, 0
      %p218 = por %p216, %p217
      %p219 = scmp.ne.s32.totalorder %s207, %s208
      %p220 = scmp.eq.s32.totalorder %s30, 1
      %p221 = por %p219, %p220
      %p223 = scmp.ne.s32.totalorder %s208, %s222
      %p224 = scmp.eq.s32.totalorder %s30, 0
      %p225 = por %p223, %p224
      %s227 = sadd.s32 %s226, 1
      %p230 = scmp.eq.s32.totalorder %s24, 1
      %p231 = scmp.ne.s32.totalorder %s226, %s228
      %p232 = scmp.eq.s32.totalorder %s24, 0
      %p233 = por %p231, %p232
      %p234 = scmp.ne.s32.totalorder %s226, %s228
      %p235 = scmp.eq.s32.totalorder %s29, 1
      %p236 = por %p234, %p235
      %p237 = scmp.ne.s32.totalorder %s228, %s229
      %p238 = scmp.eq.s32.totalorder %s29, 0
      %p239 = por %p237, %p238
      %p240 = scmp.ne.s32.totalorder %s228, %s229
      %p241 = scmp.eq.s32.totalorder %s30, 1
      %p242 = por %p240, %p241
      %p244 = scmp.ne.s32.totalorder %s229, %s243
      %p245 = scmp.eq.s32.totalorder %s30, 0
      %p246 = por %p244, %p245
      %s248 = sadd.s32 %s247, 1
      %p251 = scmp.eq.s32.totalorder %s24, 1
      %p252 = scmp.ne.s32.totalorder %s247, %s249
      %p253 = scmp.eq.s32.totalorder %s24, 0
      %p254 = por %p252, %p253
      %p255 = scmp.ne.s32.totalorder %s247, %s249
      %p256 = scmp.eq.s32.totalorder %s29, 1
      %p257 = por %p255, %p256
      %p258 = scmp.ne.s32.totalorder %s249, %s250
      %p259 = scmp.eq.s32.totalorder %s29, 0
      %p260 = por %p258, %p259
      %p261 = scmp.ne.s32.totalorder %s249, %s250
      %p262 = scmp.eq.s32.totalorder %s30, 1
      %p263 = por %p261, %p262
      %p265 = scmp.ne.s32.totalorder %s250, %s264
      %p266 = scmp.eq.s32.totalorder %s30, 0
      %p267 = por %p265, %p266
      %s269 = sadd.s32 %s268, 1
      %p272 = scmp.eq.s32.totalorder %s24, 1
      %p273 = scmp.ne.s32.totalorder %s268, %s270
      %p274 = scmp.eq.s32.totalorder %s24, 0
      %p275 = por %p273, %p274
      %p276 = scmp.ne.s32.totalorder %s268, %s270
      %p277 = scmp.eq.s32.totalorder %s29, 1
      %p278 = por %p276, %p277
      %p279 = scmp.ne.s32.totalorder %s270, %s271
      %p280 = scmp.eq.s32.totalorder %s29, 0
      %p281 = por %p279, %p280
      %p282 = scmp.ne.s32.totalorder %s270, %s271
      %p283 = scmp.eq.s32.totalorder %s30, 1
      %p284 = por %p282, %p283
      %p286 = scmp.ne.s32.totalorder %s271, %s285
      %p287 = scmp.eq.s32.totalorder %s30, 0
      %p288 = por %p286, %p287
      %s290 = sadd.s32 %s289, 1
      %p293 = scmp.eq.s32.totalorder %s24, 1
      %p294 = scmp.ne.s32.totalorder %s289, %s291
      %p295 = scmp.eq.s32.totalorder %s24, 0
      %p296 = por %p294, %p295
      %p297 = scmp.ne.s32.totalorder %s289, %s291
      %p298 = scmp.eq.s32.totalorder %s29, 1
      %p299 = por %p297, %p298
      %p300 = scmp.ne.s32.totalorder %s291, %s292
      %p301 = scmp.eq.s32.totalorder %s29, 0
      %p302 = por %p300, %p301
      %p303 = scmp.ne.s32.totalorder %s291, %s292
      %p304 = scmp.eq.s32.totalorder %s30, 1
      %p305 = por %p303, %p304
      %p307 = scmp.ne.s32.totalorder %s292, %s306
      %p308 = scmp.eq.s32.totalorder %s30, 0
      %p309 = por %p307, %p308
      %s311 = sadd.s32 %s310, 1
      %p314 = scmp.eq.s32.totalorder %s24, 1
      %p315 = scmp.ne.s32.totalorder %s310, %s312
      %p316 = scmp.eq.s32.totalorder %s24, 0
      %p317 = por %p315, %p316
      %p318 = scmp.ne.s32.totalorder %s310, %s312
      %p319 = scmp.eq.s32.totalorder %s29, 1
      %p320 = por %p318, %p319
      %p321 = scmp.ne.s32.totalorder %s312, %s313
      %p322 = scmp.eq.s32.totalorder %s29, 0
      %p323 = por %p321, %p322
      %p324 = scmp.ne.s32.totalorder %s312, %s313
      %p325 = scmp.eq.s32.totalorder %s30, 1
      %p326 = por %p324, %p325
      %p328 = scmp.ne.s32.totalorder %s313, %s327
      %p329 = scmp.eq.s32.totalorder %s30, 0
      %p330 = por %p328, %p329
      %s331 = ssub.s32 %s31, %s43
      %p332 = scmp.eq.s32.totalorder %s331, 0
      %s334 = sadd.s32 %s333, 1
      %s335 = scalar_select %p332, %s333, %s334
      %p338 = pneg %p332
      %p339 = scmp.eq.s32.totalorder %s24, 1
      %p340 = por %p338, %p339
      %p341 = scmp.ne.s32.totalorder %s333, %s336
      %p342 = scmp.eq.s32.totalorder %s24, 0
      %p343 = por %p341, %p342
      %p344 = scmp.ne.s32.totalorder %s333, %s336
      %p345 = scmp.eq.s32.totalorder %s29, 1
      %p346 = por %p344, %p345
      %p347 = scmp.ne.s32.totalorder %s336, %s337
      %p348 = scmp.eq.s32.totalorder %s29, 0
      %p349 = por %p347, %p348
      %p350 = scmp.ne.s32.totalorder %s336, %s337
      %p351 = scmp.eq.s32.totalorder %s30, 1
      %p352 = por %p350, %p351
      %p354 = scmp.ne.s32.totalorder %s337, %s353
      %p355 = scmp.eq.s32.totalorder %s30, 0
      %p356 = por %p354, %p355
      %p357 = scmp.le.s32.totalorder 1, %s24
      %p358 = scmp.lt.s32.totalorder %s24, 3
      %p359 = pnand %p357, %p358
      %p360 = pneg %p359
      // Predicated region
      $region9: #{tpu_custom_call.1} parent=5 // pred_check
        _
      $region10: #{tpu_custom_call.1} parent=5 // pred_check_branch
        %362 = sbr.rel (%p359) target = $region12
      $region11: #{tpu_custom_call.1} parent=5 // pred_region
        %s363 = ssub.s32 %s24, 1
        // Predicated region
        $region13: #{tpu_custom_call.1} parent=11 // pred_check
          %p364 = pneg %p113
        $region14: #{tpu_custom_call.1} parent=11 // pred_check_branch
          %366 = sbr.rel (%p364) target = $region16
        $region15: #{tpu_custom_call.1} parent=11 // pred_region
          %s368 = ssub.s32 32, 32
          %369 = vsyncadd [#allocation6], %s368
          %s371 = sshll.u32 %s2, 4
          %s372 = int_to_ptr.vmem [resolvable:$true] %s371
          %374 = dma.vmem_to_smem %s372, 32, [#allocation3], [#allocation6]
        $region16: #{tpu_custom_call.1} parent=11 // pred_fallthru
          _
        // Predicated region
        $region17: #{tpu_custom_call.1} parent=11 // pred_check
          %p375 = pneg %p134
        $region18: #{tpu_custom_call.1} parent=11 // pred_check_branch
          %377 = sbr.rel (%p375) target = $region20
        $region19: #{tpu_custom_call.1} parent=11 // pred_region
          _
        $region20: #{tpu_custom_call.1} parent=11 // pred_fallthru
          _
        // Predicated region
        $region21: #{tpu_custom_call.1} parent=11 // pred_check
          %p378 = pneg %p155
        $region22: #{tpu_custom_call.1} parent=11 // pred_check_branch
          %380 = sbr.rel (%p378) target = $region24
        $region23: #{tpu_custom_call.1} parent=11 // pred_region
          _
        $region24: #{tpu_custom_call.1} parent=11 // pred_fallthru
          _
        // Predicated region
        $region25: #{tpu_custom_call.1} parent=11 // pred_check
          %p381 = pneg %p176
        $region26: #{tpu_custom_call.1} parent=11 // pred_check_branch
          %383 = sbr.rel (%p381) target = $region28
        $region27: #{tpu_custom_call.1} parent=11 // pred_region
          _
        $region28: #{tpu_custom_call.1} parent=11 // pred_fallthru
          _
        // Predicated region
        $region29: #{tpu_custom_call.1} parent=11 // pred_check
          %p384 = pneg %p197
        $region30: #{tpu_custom_call.1} parent=11 // pred_check_branch
          %386 = sbr.rel (%p384) target = $region32
        $region31: #{tpu_custom_call.1} parent=11 // pred_region
          _
        $region32: #{tpu_custom_call.1} parent=11 // pred_fallthru
          _
        // Predicated region
        $region33: #{tpu_custom_call.1} parent=11 // pred_check
          %p387 = pneg %p218
        $region34: #{tpu_custom_call.1} parent=11 // pred_check_branch
          %389 = sbr.rel (%p387) target = $region36
        $region35: #{tpu_custom_call.1} parent=11 // pred_region
          _
        $region36: #{tpu_custom_call.1} parent=11 // pred_fallthru
          _
        // Predicated region
        $region37: #{tpu_custom_call.1} parent=11 // pred_check
          %p390 = pneg %p239
        $region38: #{tpu_custom_call.1} parent=11 // pred_check_branch
          %392 = sbr.rel (%p390) target = $region40
        $region39: #{tpu_custom_call.1} parent=11 // pred_region
          _
        $region40: #{tpu_custom_call.1} parent=11 // pred_fallthru
          _
        // Predicated region
        $region41: #{tpu_custom_call.1} parent=11 // pred_check
          %p393 = pneg %p260
        $region42: #{tpu_custom_call.1} parent=11 // pred_check_branch
          %395 = sbr.rel (%p393) target = $region44
        $region43: #{tpu_custom_call.1} parent=11 // pred_region
          %s397 = ssub.s32 2048, 2048
          %398 = vsyncadd [#allocation4], %s397
          %s399 = sshll.u32 [#allocation7], 4
          %s400 = int_to_ptr.vmem [resolvable:$true] %s399
          %405 = dma.hbm_to_vmem [thread:$0]  %s9, 2048, %s400, [#allocation4], 128, 128, 8
        $region44: #{tpu_custom_call.1} parent=11 // pred_fallthru
          _
        // Predicated region
        $region45: #{tpu_custom_call.1} parent=11 // pred_check
          %p406 = pneg %p281
        $region46: #{tpu_custom_call.1} parent=11 // pred_check_branch
          %408 = sbr.rel (%p406) target = $region48
        $region47: #{tpu_custom_call.1} parent=11 // pred_region
          _
        $region48: #{tpu_custom_call.1} parent=11 // pred_fallthru
          _
        // Predicated region
        $region49: #{tpu_custom_call.1} parent=11 // pred_check
          %p409 = pneg %p302
        $region50: #{tpu_custom_call.1} parent=11 // pred_check_branch
          %411 = sbr.rel (%p409) target = $region52
        $region51: #{tpu_custom_call.1} parent=11 // pred_region
          _
        $region52: #{tpu_custom_call.1} parent=11 // pred_fallthru
          _
        // Predicated region
        $region53: #{tpu_custom_call.1} parent=11 // pred_check
          %p412 = pneg %p323
        $region54: #{tpu_custom_call.1} parent=11 // pred_check_branch
          %414 = sbr.rel (%p412) target = $region56
        $region55: #{tpu_custom_call.1} parent=11 // pred_region
          _
        $region56: #{tpu_custom_call.1} parent=11 // pred_fallthru
          _
      $region12: #{tpu_custom_call.1} parent=5 // pred_fallthru
        _
      %p415 = scmp.lt.s32.totalorder %s24, 2
      // Predicated region
      $region57: #{tpu_custom_call.1} parent=5 // pred_check
        %p416 = pneg %p415
      $region58: #{tpu_custom_call.1} parent=5 // pred_check_branch
        %418 = sbr.rel (%p416) target = $region60
      $region59: #{tpu_custom_call.1} parent=5 // pred_region
        // Predicated region
        $region61: #{tpu_custom_call.1} parent=59 // pred_check
          %p419 = pneg %p58
        $region62: #{tpu_custom_call.1} parent=59 // pred_check_branch
          %421 = sbr.rel (%p419) target = $region64
        $region63: #{tpu_custom_call.1} parent=59 // pred_region
          %p422 = scmp.lt.s32.totalorder %s31, 1
          %s423 = scalar_select %p422, %s31, 1
          %p424 = scmp.lt.s32.totalorder %s32, 0
          %s425 = scalar_select %p424, %s32, 0
          %s426 = sadd.s32 %s425, %s423
          %s427 = smul.addr %s426, 8
          %s428 = scalar_lea.vmem %s0, %s427
        $region64: #{tpu_custom_call.1} parent=59 // pred_fallthru
          _
        // Predicated region
        $region65: #{tpu_custom_call.1} parent=59 // pred_check
          %p429 = pneg %p86
        $region66: #{tpu_custom_call.1} parent=59 // pred_check_branch
          %431 = sbr.rel (%p429) target = $region68
        $region67: #{tpu_custom_call.1} parent=59 // pred_region
          %p432 = scmp.lt.s32.totalorder %s31, 1
          %s433 = scalar_select %p432, %s31, 1
          %p434 = scmp.lt.s32.totalorder %s32, 0
          %s435 = scalar_select %p434, %s32, 0
          %s436 = sadd.s32 %s435, %s433
          %s437 = smul.addr %s436, 8
          %s438 = scalar_lea.vmem %s1, %s437
        $region68: #{tpu_custom_call.1} parent=59 // pred_fallthru
          _
      $region60: #{tpu_custom_call.1} parent=5 // pred_fallthru
        _
      %p439 = scmp.le.s32.totalorder 1, %s24
      %p440 = scmp.lt.s32.totalorder %s24, 3
      %p441 = pnand %p439, %p440
      %p442 = pneg %p441
      // Predicated region
      $region69: #{tpu_custom_call.1} parent=5 // pred_check
        _
      $region70: #{tpu_custom_call.1} parent=5 // pred_check_branch
        %444 = sbr.rel (%p441) target = $region72
      $region71: #{tpu_custom_call.1} parent=5 // pred_region
        %s445 = ssub.s32 %s24, 1
        // Predicated region
        $region73: #{tpu_custom_call.1} parent=71 // pred_check
          %p446 = pneg %p113
        $region74: #{tpu_custom_call.1} parent=71 // pred_check_branch
          %448 = sbr.rel (%p446) target = $region76
        $region75: #{tpu_custom_call.1} parent=71 // pred_region
          %449 = dma.done [#allocation6], 32
        $region76: #{tpu_custom_call.1} parent=71 // pred_fallthru
          _
        // Predicated region
        $region77: #{tpu_custom_call.1} parent=71 // pred_check
          %p450 = pneg %p260
        $region78: #{tpu_custom_call.1} parent=71 // pred_check_branch
          %452 = sbr.rel (%p450) target = $region80
        $region79: #{tpu_custom_call.1} parent=71 // pred_region
          %453 = dma.done [#allocation4], 2048
        $region80: #{tpu_custom_call.1} parent=71 // pred_fallthru
          _
        %454 = sfence
        %p455 = scmp.lt.s32.totalorder %s33, 1
        %s456 = scalar_select %p455, %s33, 1
        %p457 = scmp.lt.s32.totalorder %s34, 0
        %s458 = scalar_select %p457, %s34, 0
        %s459 = sadd.s32 %s458, %s456
        %s460 = smul.addr %s459, 8
        %s461 = scalar_lea.vmem %s0, %s460
        %p462 = pneg %p64
        %p463 = pneg %p61
        %p464 = scmp.lt.s32.totalorder %s33, 1
        %s465 = scalar_select %p464, %s33, 1
        %p466 = scmp.lt.s32.totalorder %s34, 0
        %s467 = scalar_select %p466, %s34, 0
        %s468 = sadd.s32 %s467, %s465
        %s469 = smul.addr %s468, 8
        %s470 = scalar_lea.vmem %s1, %s469
        %p471 = pneg %p92
        %p472 = pneg %p89
        %p473 = pneg %p113
        %p474 = pneg %p110
        %p475 = pneg %p134
        %p476 = pneg %p131
        %p477 = pneg %p155
        %p478 = pneg %p152
        %p479 = pneg %p176
        %p480 = pneg %p173
        %p481 = pneg %p197
        %p482 = pneg %p194
        %p483 = pneg %p218
        %p484 = pneg %p215
        %p485 = pneg %p239
        %p486 = pneg %p236
        %p487 = pneg %p260
        %p488 = pneg %p257
        %p489 = pneg %p281
        %p490 = pneg %p278
        %p491 = pneg %p302
        %p492 = pneg %p299
        %p493 = pneg %p323
        %p494 = pneg %p320
        %p495 = pneg %p349
        %p496 = pneg %p346
        %s497 = sand.u32 %s336, 1
        %s498 = scalar_lea.sflag [#allocation5], %s497
        %s499 = sand.u32 %s336, 1
        %s500 = scalar_lea.vmem [#allocation8], %s499
        %p501 = scmp.lt.s32.totalorder %s33, 1
        %s502 = scalar_select %p501, %s33, 1
        %p503 = scmp.lt.s32.totalorder %s34, 0
        %s504 = scalar_select %p503, %s34, 0
        %s505 = sadd.s32 %s504, %s502
        %s506 = smul.addr %s505, 8
        %s507 = scalar_lea.vmem %s0, %s506
        %p508 = scmp.lt.s32.totalorder %s33, 1
        %s509 = scalar_select %p508, %s33, 1
        %p510 = scmp.lt.s32.totalorder %s34, 0
        %s511 = scalar_select %p510, %s34, 0
        %s512 = sadd.s32 %s511, %s509
        %s513 = smul.addr %s512, 8
        %s514 = scalar_lea.vmem %s1, %s513
        %p515 = scmp.eq.s32.totalorder %s34, 0
        // Predicated region
        $region81: #{tpu_custom_call.1} parent=71 // pred_check
          %p516 = pneg %p515
        $region82: #{tpu_custom_call.1} parent=71 // pred_check_branch
          %518 = sbr.rel (%p516) target = $region84
        $region83: #{tpu_custom_call.1} parent=71 // pred_region
          %vm519 = vcmask 319488
          %520 = vst.msk [vmem:[#allocation2] sm:$0x1] %vm519, 0.0
        $region84: #{tpu_custom_call.1} parent=71 // pred_fallthru
          _
        %v521 = vld [vmem:[%s507] sm:$0xff]
        %v522 = vld [vmem:[%s514] sm:$0xff]
        %v523 = vld [vmem:[%s3] sm:$0x3f]
        %v524 = vld [vmem:[%s5] sm:$0x7]
        %vm525 = vcmask 23552
        %v527 = vsel %vm525, %v522, 0
        %vm529 = vcmask 1042432
        %v531 = vsel %vm529, %v524, 0
        %533 = vmatprep.subr.mxu0 0.0
        %534 = vmatpush1.msra.mxu0 %v531
        %535 = vmatprep.subr.mxu0 0.0
        %536 = vmatpush1.msra.mxu0 0.0
        %537 = vmatprep.subr.mxu0 0.0
        %538 = vmatpush1.msra.mxu0 0.0
        %539 = vmatprep.subr.mxu0 0.0
        %540 = vmatpush1.msra.mxu0 0.0
        %541 = vmatprep.subr.mxu0 0.0
        %542 = vmatpush1.msra.mxu0 0.0
        %543 = vmatprep.subr.mxu0 0.0
        %544 = vmatpush1.msra.mxu0 0.0
        %545 = vmatprep.subr.mxu0 0.0
        %546 = vmatpush1.msra.mxu0 0.0
        %547 = vmatprep.subr.mxu0 0.0
        %548 = vmatpush1.msra.mxu0 0.0
        %549 = vmatprep.subr.mxu0 0.0
        %550 = vmatpush1.msra.mxu0 0.0
        %551 = vmatprep.subr.mxu0 0.0
        %552 = vmatpush1.msra.mxu0 0.0
        %553 = vmatprep.subr.mxu0 0.0
        %554 = vmatpush1.msra.mxu0 0.0
        %555 = vmatprep.subr.mxu0 0.0
        %556 = vmatpush1.msra.mxu0 0.0
        %557 = vmatprep.subr.mxu0 0.0
        %558 = vmatpush1.msra.mxu0 0.0
        %559 = vmatprep.subr.mxu0 0.0
        %560 = vmatpush1.msra.mxu0 0.0
        %561 = vmatprep.subr.mxu0 0.0
        %562 = vmatpush1.msra.mxu0 0.0
        %563 = vmatprep.subr.mxu0 0.0
        %564 = vmatpush1.msra.mxu0 0.0
        %565 = vmatprep.subr.mxu0 0.0
        %566 = vmatpush1.msra.mxu0 0.0
        %567 = vmatprep.subr.mxu0 0.0
        %568 = vmatpush1.msra.mxu0 0.0
        %569 = vmatprep.subr.mxu0 0.0
        %570 = vmatpush1.msra.mxu0 0.0
        %571 = vmatprep.subr.mxu0 0.0
        %572 = vmatpush1.msra.mxu0 0.0
        %573 = vmatprep.subr.mxu0 0.0
        %574 = vmatpush1.msra.mxu0 0.0
        %575 = vmatprep.subr.mxu0 0.0
        %576 = vmatpush1.msra.mxu0 0.0
        %577 = vmatprep.subr.mxu0 0.0
        %578 = vmatpush1.msra.mxu0 0.0
        %579 = vmatprep.subr.mxu0 0.0
        %580 = vmatpush1.msra.mxu0 0.0
        %581 = vmatprep.subr.mxu0 0.0
        %582 = vmatpush1.msra.mxu0 0.0
        %583 = vmatprep.subr.mxu0 0.0
        %584 = vmatpush1.msra.mxu0 0.0
        %585 = vmatprep.subr.mxu0 0.0
        %586 = vmatpush1.msra.mxu0 0.0
        %587 = vmatprep.subr.mxu0 0.0
        %588 = vmatpush1.msra.mxu0 0.0
        %589 = vmatprep.subr.mxu0 0.0
        %590 = vmatpush1.msra.mxu0 0.0
        %591 = vmatprep.subr.mxu0 0.0
        %592 = vmatpush1.msra.mxu0 0.0
        %593 = vmatprep.subr.mxu0 0.0
        %594 = vmatpush1.msra.mxu0 0.0
        %595 = vmatprep.subr.mxu0 0.0
        %596 = vmatpush1.msra.mxu0 0.0
        %597 = vmatprep.mubr.f32.mxu0 0.0
        %598 = vmatmul.mubr.f32.gmra.mrb[0].mxu0 %v527
        %v599 = vpop.f32.mrb[0].mxu0
        %v600 = vadd.f32 0.0, %v599
        %v601 = vpop.f32.mrb[0].mxu0
        %602 = vdwg.mxu0
        %vm603 = vcmask 48128
        %v605 = vsel %vm603, %v521, 0
        %vm607 = vcmask 1045504
        %v609 = vsel %vm607, %v523, 0
        %611 = vmatprep.subr.mxu0 0.0
        %612 = vmatpush1.msra.mxu0 %v609
        %613 = vmatprep.subr.mxu0 0.0
        %614 = vmatpush1.msra.mxu0 0.0
        %615 = vmatprep.subr.mxu0 0.0
        %616 = vmatpush1.msra.mxu0 0.0
        %617 = vmatprep.subr.mxu0 0.0
        %618 = vmatpush1.msra.mxu0 0.0
        %619 = vmatprep.subr.mxu0 0.0
        %620 = vmatpush1.msra.mxu0 0.0
        %621 = vmatprep.subr.mxu0 0.0
        %622 = vmatpush1.msra.mxu0 0.0
        %623 = vmatprep.subr.mxu0 0.0
        %624 = vmatpush1.msra.mxu0 0.0
        %625 = vmatprep.subr.mxu0 0.0
        %626 = vmatpush1.msra.mxu0 0.0
        %627 = vmatprep.subr.mxu0 0.0
        %628 = vmatpush1.msra.mxu0 0.0
        %629 = vmatprep.subr.mxu0 0.0
        %630 = vmatpush1.msra.mxu0 0.0
        %631 = vmatprep.subr.mxu0 0.0
        %632 = vmatpush1.msra.mxu0 0.0
        %633 = vmatprep.subr.mxu0 0.0
        %634 = vmatpush1.msra.mxu0 0.0
        %635 = vmatprep.subr.mxu0 0.0
        %636 = vmatpush1.msra.mxu0 0.0
        %637 = vmatprep.subr.mxu0 0.0
        %638 = vmatpush1.msra.mxu0 0.0
        %639 = vmatprep.subr.mxu0 0.0
        %640 = vmatpush1.msra.mxu0 0.0
        %641 = vmatprep.subr.mxu0 0.0
        %642 = vmatpush1.msra.mxu0 0.0
        %643 = vmatprep.subr.mxu0 0.0
        %644 = vmatpush1.msra.mxu0 0.0
        %645 = vmatprep.subr.mxu0 0.0
        %646 = vmatpush1.msra.mxu0 0.0
        %647 = vmatprep.subr.mxu0 0.0
        %648 = vmatpush1.msra.mxu0 0.0
        %649 = vmatprep.subr.mxu0 0.0
        %650 = vmatpush1.msra.mxu0 0.0
        %651 = vmatprep.subr.mxu0 0.0
        %652 = vmatpush1.msra.mxu0 0.0
        %653 = vmatprep.subr.mxu0 0.0
        %654 = vmatpush1.msra.mxu0 0.0
        %655 = vmatprep.subr.mxu0 0.0
        %656 = vmatpush1.msra.mxu0 0.0
        %657 = vmatprep.subr.mxu0 0.0
        %658 = vmatpush1.msra.mxu0 0.0
        %659 = vmatprep.subr.mxu0 0.0
        %660 = vmatpush1.msra.mxu0 0.0
        %661 = vmatprep.subr.mxu0 0.0
        %662 = vmatpush1.msra.mxu0 0.0
        %663 = vmatprep.subr.mxu0 0.0
        %664 = vmatpush1.msra.mxu0 0.0
        %665 = vmatprep.subr.mxu0 0.0
        %666 = vmatpush1.msra.mxu0 0.0
        %667 = vmatprep.subr.mxu0 0.0
        %668 = vmatpush1.msra.mxu0 0.0
        %669 = vmatprep.subr.mxu0 0.0
        %670 = vmatpush1.msra.mxu0 0.0
        %671 = vmatprep.subr.mxu0 0.0
        %672 = vmatpush1.msra.mxu0 0.0
        %673 = vmatprep.subr.mxu0 0.0
        %674 = vmatpush1.msra.mxu0 0.0
        %675 = vmatprep.mubr.f32.mxu0 0.0
        %676 = vmatmul.mubr.f32.gmra.mrb[0].mxu0 %v605
        %v677 = vpop.f32.mrb[0].mxu0
        %v678 = vadd.f32 %v600, %v677
        %v679 = vpop.f32.mrb[0].mxu0
        %680 = vdwg.mxu0
        %s681 = smul.u32 %s33, 128
        %s682 = sld [smem:[#allocation3 + %s681]]
        %v683 = vld [vmem:[%s4] sm:$0x1]
        %v684 = vstv %s682
        %v685 = vmul.f32 %v684, %v683
        %s686 = sadd.s32 %s681, 1
        %s687 = sld [smem:[#allocation3 + %s686]]
        %v688 = vld [vmem:[%s4 + $0x1] sm:$0x1]
        %v689 = vstv %s687
        %v690 = vmul.f32 %v689, %v688
        %v691 = vadd.f32 %v685, %v690
        %v692 = vlaneseq
        %v693 = vshrl.u32 %v692, 7
        %v694 = vsub.s32 0, %v693
        %v695 = vrot.slane %v691, %v694
        %v696 = vadd.f32 %v678, %v695
        %v697 = vld [vmem:[%s6] sm:$0x1]
        %v699 = vlaneseq
        %v700 = vshrl.u32 %v699, 7
        %v701 = vsub.s32 0, %v700
        %v702 = vrot.slane %v697, %v701
        %v704 = vadd.f32 %v696, %v702
        %v705 = vmax.f32 %v704, 0.0
        %v706 = vld [vmem:[%s7] sm:$0xff]
        %v707 = vld [vmem:[%s7 + $0x8] sm:$0xff]
        %v708 = vld [vmem:[%s7 + $0x10] sm:$0xff]
        %v709 = vld [vmem:[%s7 + $0x18] sm:$0xff]
        %v710 = vld [vmem:[%s7 + $0x20] sm:$0xff]
        %v711 = vld [vmem:[%s7 + $0x28] sm:$0xff]
        %v712 = vld [vmem:[%s7 + $0x30] sm:$0xff]
        %v713 = vld [vmem:[%s7 + $0x38] sm:$0xff]
        %v714 = vld [vmem:[%s7 + $0x40] sm:$0xff]
        %v715 = vld [vmem:[%s7 + $0x48] sm:$0xff]
        %v716 = vld [vmem:[%s7 + $0x50] sm:$0xff]
        %v717 = vld [vmem:[%s7 + $0x58] sm:$0xff]
        %v718 = vld [vmem:[%s7 + $0x60] sm:$0xff]
        %v719 = vld [vmem:[%s7 + $0x68] sm:$0xff]
        %v720 = vld [vmem:[%s7 + $0x70] sm:$0xff]
        %v721 = vld [vmem:[%s7 + $0x78] sm:$0xff]
        %v722 = vld [vmem:[%s8] sm:$0x1]
        %v724 = vlaneseq
        %v725 = vshrl.u32 %v724, 7
        %v726 = vsub.s32 0, %v725
        %v727 = vrot.slane %v722, %v726
        %729 = vmatprep.subr.mxu0 0.0
        %730 = vmatpush1.msra.mxu0 %v706
        %731 = vmatprep.subr.mxu0 0.0
        %732 = vmatpush1.msra.mxu0 %v707
        %733 = vmatprep.subr.mxu0 0.0
        %734 = vmatpush1.msra.mxu0 %v708
        %735 = vmatprep.subr.mxu0 0.0
        %736 = vmatpush1.msra.mxu0 %v709
        %737 = vmatprep.subr.mxu0 0.0
        %738 = vmatpush1.msra.mxu0 %v710
        %739 = vmatprep.subr.mxu0 0.0
        %740 = vmatpush1.msra.mxu0 %v711
        %741 = vmatprep.subr.mxu0 0.0
        %742 = vmatpush1.msra.mxu0 %v712
        %743 = vmatprep.subr.mxu0 0.0
        %744 = vmatpush1.msra.mxu0 %v713
        %745 = vmatprep.subr.mxu0 0.0
        %746 = vmatpush1.msra.mxu0 %v714
        %747 = vmatprep.subr.mxu0 0.0
        %748 = vmatpush1.msra.mxu0 %v715
        %749 = vmatprep.subr.mxu0 0.0
        %750 = vmatpush1.msra.mxu0 %v716
        %751 = vmatprep.subr.mxu0 0.0
        %752 = vmatpush1.msra.mxu0 %v717
        %753 = vmatprep.subr.mxu0 0.0
        %754 = vmatpush1.msra.mxu0 %v718
        %755 = vmatprep.subr.mxu0 0.0
        %756 = vmatpush1.msra.mxu0 %v719
        %757 = vmatprep.subr.mxu0 0.0
        %758 = vmatpush1.msra.mxu0 %v720
        %759 = vmatprep.subr.mxu0 0.0
        %760 = vmatpush1.msra.mxu0 %v721
        %761 = vmatprep.subr.mxu0 0.0
        %762 = vmatpush1.msra.mxu0 0.0
        %763 = vmatprep.subr.mxu0 0.0
        %764 = vmatpush1.msra.mxu0 0.0
        %765 = vmatprep.subr.mxu0 0.0
        %766 = vmatpush1.msra.mxu0 0.0
        %767 = vmatprep.subr.mxu0 0.0
        %768 = vmatpush1.msra.mxu0 0.0
        %769 = vmatprep.subr.mxu0 0.0
        %770 = vmatpush1.msra.mxu0 0.0
        %771 = vmatprep.subr.mxu0 0.0
        %772 = vmatpush1.msra.mxu0 0.0
        %773 = vmatprep.subr.mxu0 0.0
        %774 = vmatpush1.msra.mxu0 0.0
        %775 = vmatprep.subr.mxu0 0.0
        %776 = vmatpush1.msra.mxu0 0.0
        %777 = vmatprep.subr.mxu0 0.0
        %778 = vmatpush1.msra.mxu0 0.0
        %779 = vmatprep.subr.mxu0 0.0
        %780 = vmatpush1.msra.mxu0 0.0
        %781 = vmatprep.subr.mxu0 0.0
        %782 = vmatpush1.msra.mxu0 0.0
        %783 = vmatprep.subr.mxu0 0.0
        %784 = vmatpush1.msra.mxu0 0.0
        %785 = vmatprep.subr.mxu0 0.0
        %786 = vmatpush1.msra.mxu0 0.0
        %787 = vmatprep.subr.mxu0 0.0
        %788 = vmatpush1.msra.mxu0 0.0
        %789 = vmatprep.subr.mxu0 0.0
        %790 = vmatpush1.msra.mxu0 0.0
        %791 = vmatprep.subr.mxu0 0.0
        %792 = vmatpush1.msra.mxu0 0.0
        %793 = vmatprep.mubr.f32.mxu0 0.0
        %794 = vmatmul.mubr.f32.gmra.mrb[0].mxu0 %v705
        %v795 = vpop.f32.mrb[0].mxu0
        %v796 = vadd.f32 %v727, %v795
        %v797 = vpop.f32.mrb[0].mxu0
        %798 = vdwg.mxu0
        %v799 = vmax.f32 %v796, 0.0
        %v800 = vld [vmem:[#allocation7] sm:$0xff]
        %v801 = vld [vmem:[#allocation7 + $0x8] sm:$0xff]
        %v802 = vld [vmem:[#allocation7 + $0x10] sm:$0xff]
        %v803 = vld [vmem:[#allocation7 + $0x18] sm:$0xff]
        %v804 = vld [vmem:[#allocation7 + $0x20] sm:$0xff]
        %v805 = vld [vmem:[#allocation7 + $0x28] sm:$0xff]
        %v806 = vld [vmem:[#allocation7 + $0x30] sm:$0xff]
        %v807 = vld [vmem:[#allocation7 + $0x38] sm:$0xff]
        %v808 = vld [vmem:[#allocation7 + $0x40] sm:$0xff]
        %v809 = vld [vmem:[#allocation7 + $0x48] sm:$0xff]
        %v810 = vld [vmem:[#allocation7 + $0x50] sm:$0xff]
        %v811 = vld [vmem:[#allocation7 + $0x58] sm:$0xff]
        %v812 = vld [vmem:[#allocation7 + $0x60] sm:$0xff]
        %v813 = vld [vmem:[#allocation7 + $0x68] sm:$0xff]
        %v814 = vld [vmem:[#allocation7 + $0x70] sm:$0xff]
        %v815 = vld [vmem:[#allocation7 + $0x78] sm:$0xff]
        %v816 = vld [vmem:[%s10] sm:$0x1]
        %v818 = vlaneseq
        %v819 = vshrl.u32 %v818, 7
        %v820 = vsub.s32 0, %v819
        %v821 = vrot.slane %v816, %v820
        %823 = vmatprep.subr.mxu0 0.0
        %824 = vmatpush1.msra.mxu0 %v800
        %825 = vmatprep.subr.mxu0 0.0
        %826 = vmatpush1.msra.mxu0 %v801
        %827 = vmatprep.subr.mxu0 0.0
        %828 = vmatpush1.msra.mxu0 %v802
        %829 = vmatprep.subr.mxu0 0.0
        %830 = vmatpush1.msra.mxu0 %v803
        %831 = vmatprep.subr.mxu0 0.0
        %832 = vmatpush1.msra.mxu0 %v804
        %833 = vmatprep.subr.mxu0 0.0
        %834 = vmatpush1.msra.mxu0 %v805
        %835 = vmatprep.subr.mxu0 0.0
        %836 = vmatpush1.msra.mxu0 %v806
        %837 = vmatprep.subr.mxu0 0.0
        %838 = vmatpush1.msra.mxu0 %v807
        %839 = vmatprep.subr.mxu0 0.0
        %840 = vmatpush1.msra.mxu0 %v808
        %841 = vmatprep.subr.mxu0 0.0
        %842 = vmatpush1.msra.mxu0 %v809
        %843 = vmatprep.subr.mxu0 0.0
        %844 = vmatpush1.msra.mxu0 %v810
        %845 = vmatprep.subr.mxu0 0.0
        %846 = vmatpush1.msra.mxu0 %v811
        %847 = vmatprep.subr.mxu0 0.0
        %848 = vmatpush1.msra.mxu0 %v812
        %849 = vmatprep.subr.mxu0 0.0
        %850 = vmatpush1.msra.mxu0 %v813
        %851 = vmatprep.subr.mxu0 0.0
        %852 = vmatpush1.msra.mxu0 %v814
        %853 = vmatprep.subr.mxu0 0.0
        %854 = vmatpush1.msra.mxu0 %v815
        %855 = vmatprep.subr.mxu0 0.0
        %856 = vmatpush1.msra.mxu0 0.0
        %857 = vmatprep.subr.mxu0 0.0
        %858 = vmatpush1.msra.mxu0 0.0
        %859 = vmatprep.subr.mxu0 0.0
        %860 = vmatpush1.msra.mxu0 0.0
        %861 = vmatprep.subr.mxu0 0.0
        %862 = vmatpush1.msra.mxu0 0.0
        %863 = vmatprep.subr.mxu0 0.0
        %864 = vmatpush1.msra.mxu0 0.0
        %865 = vmatprep.subr.mxu0 0.0
        %866 = vmatpush1.msra.mxu0 0.0
        %867 = vmatprep.subr.mxu0 0.0
        %868 = vmatpush1.msra.mxu0 0.0
        %869 = vmatprep.subr.mxu0 0.0
        %870 = vmatpush1.msra.mxu0 0.0
        %871 = vmatprep.subr.mxu0 0.0
        %872 = vmatpush1.msra.mxu0 0.0
        %873 = vmatprep.subr.mxu0 0.0
        %874 = vmatpush1.msra.mxu0 0.0
        %875 = vmatprep.subr.mxu0 0.0
        %876 = vmatpush1.msra.mxu0 0.0
        %877 = vmatprep.subr.mxu0 0.0
        %878 = vmatpush1.msra.mxu0 0.0
        %879 = vmatprep.subr.mxu0 0.0
        %880 = vmatpush1.msra.mxu0 0.0
        %881 = vmatprep.subr.mxu0 0.0
        %882 = vmatpush1.msra.mxu0 0.0
        %883 = vmatprep.subr.mxu0 0.0
        %884 = vmatpush1.msra.mxu0 0.0
        %885 = vmatprep.subr.mxu0 0.0
        %886 = vmatpush1.msra.mxu0 0.0
        %887 = vmatprep.mubr.f32.mxu0 0.0
        %888 = vmatmul.mubr.f32.gmra.mrb[0].mxu0 %v799
        %v889 = vpop.f32.mrb[0].mxu0
        %v890 = vadd.f32 %v821, %v889
        %v891 = vpop.f32.mrb[0].mxu0
        %892 = vdwg.mxu0
        %v893 = vmax.f32 %v890, 0.0
        %v894 = vld [vmem:[%s11] sm:$0xff]
        %v895 = vld [vmem:[%s11 + $0x8] sm:$0xff]
        %v896 = vld [vmem:[%s11 + $0x10] sm:$0xff]
        %v897 = vld [vmem:[%s11 + $0x18] sm:$0xff]
        %v898 = vld [vmem:[%s11 + $0x20] sm:$0xff]
        %v899 = vld [vmem:[%s11 + $0x28] sm:$0xff]
        %v900 = vld [vmem:[%s11 + $0x30] sm:$0xff]
        %v901 = vld [vmem:[%s11 + $0x38] sm:$0xff]
        %v902 = vld [vmem:[%s11 + $0x40] sm:$0xff]
        %v903 = vld [vmem:[%s11 + $0x48] sm:$0xff]
        %v904 = vld [vmem:[%s11 + $0x50] sm:$0xff]
        %v905 = vld [vmem:[%s11 + $0x58] sm:$0xff]
        %v906 = vld [vmem:[%s11 + $0x60] sm:$0xff]
        %v907 = vld [vmem:[%s11 + $0x68] sm:$0xff]
        %v908 = vld [vmem:[%s11 + $0x70] sm:$0xff]
        %v909 = vld [vmem:[%s11 + $0x78] sm:$0xff]
        %v910 = vld [vmem:[%s12] sm:$0x1]
        %v912 = vlaneseq
        %v913 = vshrl.u32 %v912, 7
        %v914 = vsub.s32 0, %v913
        %v915 = vrot.slane %v910, %v914
        %917 = vmatprep.subr.mxu0 0.0
        %918 = vmatpush1.msra.mxu0 %v894
        %919 = vmatprep.subr.mxu0 0.0
        %920 = vmatpush1.msra.mxu0 %v895
        %921 = vmatprep.subr.mxu0 0.0
        %922 = vmatpush1.msra.mxu0 %v896
        %923 = vmatprep.subr.mxu0 0.0
        %924 = vmatpush1.msra.mxu0 %v897
        %925 = vmatprep.subr.mxu0 0.0
        %926 = vmatpush1.msra.mxu0 %v898
        %927 = vmatprep.subr.mxu0 0.0
        %928 = vmatpush1.msra.mxu0 %v899
        %929 = vmatprep.subr.mxu0 0.0
        %930 = vmatpush1.msra.mxu0 %v900
        %931 = vmatprep.subr.mxu0 0.0
        %932 = vmatpush1.msra.mxu0 %v901
        %933 = vmatprep.subr.mxu0 0.0
        %934 = vmatpush1.msra.mxu0 %v902
        %935 = vmatprep.subr.mxu0 0.0
        %936 = vmatpush1.msra.mxu0 %v903
        %937 = vmatprep.subr.mxu0 0.0
        %938 = vmatpush1.msra.mxu0 %v904
        %939 = vmatprep.subr.mxu0 0.0
        %940 = vmatpush1.msra.mxu0 %v905
        %941 = vmatprep.subr.mxu0 0.0
        %942 = vmatpush1.msra.mxu0 %v906
        %943 = vmatprep.subr.mxu0 0.0
        %944 = vmatpush1.msra.mxu0 %v907
        %945 = vmatprep.subr.mxu0 0.0
        %946 = vmatpush1.msra.mxu0 %v908
        %947 = vmatprep.subr.mxu0 0.0
        %948 = vmatpush1.msra.mxu0 %v909
        %949 = vmatprep.subr.mxu0 0.0
        %950 = vmatpush1.msra.mxu0 0.0
        %951 = vmatprep.subr.mxu0 0.0
        %952 = vmatpush1.msra.mxu0 0.0
        %953 = vmatprep.subr.mxu0 0.0
        %954 = vmatpush1.msra.mxu0 0.0
        %955 = vmatprep.subr.mxu0 0.0
        %956 = vmatpush1.msra.mxu0 0.0
        %957 = vmatprep.subr.mxu0 0.0
        %958 = vmatpush1.msra.mxu0 0.0
        %959 = vmatprep.subr.mxu0 0.0
        %960 = vmatpush1.msra.mxu0 0.0
        %961 = vmatprep.subr.mxu0 0.0
        %962 = vmatpush1.msra.mxu0 0.0
        %963 = vmatprep.subr.mxu0 0.0
        %964 = vmatpush1.msra.mxu0 0.0
        %965 = vmatprep.subr.mxu0 0.0
        %966 = vmatpush1.msra.mxu0 0.0
        %967 = vmatprep.subr.mxu0 0.0
        %968 = vmatpush1.msra.mxu0 0.0
        %969 = vmatprep.subr.mxu0 0.0
        %970 = vmatpush1.msra.mxu0 0.0
        %971 = vmatprep.subr.mxu0 0.0
        %972 = vmatpush1.msra.mxu0 0.0
        %973 = vmatprep.subr.mxu0 0.0
        %974 = vmatpush1.msra.mxu0 0.0
        %975 = vmatprep.subr.mxu0 0.0
        %976 = vmatpush1.msra.mxu0 0.0
        %977 = vmatprep.subr.mxu0 0.0
        %978 = vmatpush1.msra.mxu0 0.0
        %979 = vmatprep.subr.mxu0 0.0
        %980 = vmatpush1.msra.mxu0 0.0
        %981 = vmatprep.mubr.f32.mxu0 0.0
        %982 = vmatmul.mubr.f32.gmra.mrb[0].mxu0 %v893
        %v983 = vpop.f32.mrb[0].mxu0
        %v984 = vadd.f32 %v915, %v983
        %v985 = vpop.f32.mrb[0].mxu0
        %986 = vdwg.mxu0
        %s987 = smul.u32 %s34, 8
        %v988 = vlaneseq
        %v989 = vshrl.u32 %v988, 7
        %v990 = vstv %s987
        %v991 = vadd.s32 %v990, %v989
        %vm992 = vcmp.lt.s32.totalorder %v991, 8
        %v993 = vsel %vm992, %v984, 0.0
        %v994 = vld [vmem:[#allocation2] sm:$0x1]
        %vm995 = vcmask 326656
        %v996 = vsel %vm995, %v993, 0.0
        %v997 = vrot.slane %v996, 4
        %v998 = vadd.f32 %v996, %v997
        %v999 = vrot.slane %v998, 2
        %v1000 = vadd.f32 %v998, %v999
        %v1001 = vrot.slane %v1000, 1
        %v1002 = vadd.f32 %v1000, %v1001
        %v1003 = vadd.f32 %v994, %v1002
        %vm1004 = vcmask 319488
        %1005 = vst.msk [vmem:[#allocation2] sm:$0x1] %vm1004, %v1003
        // Predicated region
        $region85: #{tpu_custom_call.1} parent=71 // pred_check
          %p1006 = pneg %p515
        $region86: #{tpu_custom_call.1} parent=71 // pred_check_branch
          %1008 = sbr.rel (%p1006) target = $region88
        $region87: #{tpu_custom_call.1} parent=71 // pred_region
          %v1009 = vld [vmem:[#allocation2] sm:$0x1]
          %v1010 = vmul.f32 %v1009, 0.125
          %1011 = vst.msk [vmem:[%s500] sm:$0x1] %vm1004, %v1010
        $region88: #{tpu_custom_call.1} parent=71 // pred_fallthru
          _
        %s1012 = sand.u32 %s336, 1
        %s1013 = scalar_lea.sflag [#allocation5], %s1012
        %s1014 = sand.u32 %s336, 1
        %s1015 = scalar_lea.vmem [#allocation8], %s1014
        // Predicated region
        $region89: #{tpu_custom_call.1} parent=71 // pred_check
          %p1016 = pneg %p346
        $region90: #{tpu_custom_call.1} parent=71 // pred_check_branch
          %1018 = sbr.rel (%p1016) target = $region92
        $region91: #{tpu_custom_call.1} parent=71 // pred_region
          %s1020 = ssub.s32 16, 16
          %1021 = vsyncadd %s1013, %s1020
          %s1022 = smul.addr %s33, 16
          %s1023 = scalar_lea.hbm %s13, %s1022
          %s1025 = sshll.u32 %s1015, 4
          %s1026 = int_to_ptr.vmem [resolvable:$true] %s1025
          %1028 = dma.vmem_to_hbm [thread:$0]  %s1026, 16, %s1023, %s1013
        $region92: #{tpu_custom_call.1} parent=71 // pred_fallthru
          _
      $region72: #{tpu_custom_call.1} parent=5 // pred_fallthru
        _
      %p1029 = scmp.le.s32.totalorder 2, %s24
      // Predicated region
      $region93: #{tpu_custom_call.1} parent=5 // pred_check
        %p1030 = pneg %p1029
      $region94: #{tpu_custom_call.1} parent=5 // pred_check_branch
        %1032 = sbr.rel (%p1030) target = $region96
      $region95: #{tpu_custom_call.1} parent=5 // pred_region
        %s1033 = ssub.s32 %s24, 2
        // Predicated region
        $region97: #{tpu_custom_call.1} parent=95 // pred_check
          %p1034 = pneg %p352
        $region98: #{tpu_custom_call.1} parent=95 // pred_check_branch
          %1036 = sbr.rel (%p1034) target = $region100
        $region99: #{tpu_custom_call.1} parent=95 // pred_region
          %s1037 = sand.u32 %s337, 1
          %s1038 = scalar_lea.sflag [#allocation5], %s1037
          %s1039 = sand.u32 %s337, 1
          %s1040 = scalar_lea.vmem [#allocation8], %s1039
          %1041 = dma.done %s1038, 16
        $region100: #{tpu_custom_call.1} parent=95 // pred_fallthru
          _
      $region96: #{tpu_custom_call.1} parent=5 // pred_fallthru
        _
    $region6: #{tpu_custom_call.1} parent=1 // loop_footer
      %s28 = sadd.s32 1, %s24
    $region7: #{tpu_custom_call.1} parent=1 // loop_footer_branch
      %23 = sbr.rel target = $region3
    $region8: #{tpu_custom_call.1} parent=1 // loop_exit
      _
    %1042 = vsyncpa [#allocation4], 1
    %s1043 = scalar_lea.sflag [#allocation4], 1
    %1044 = vsyncpa %s1043, 1
    %1045 = vsyncpa [#allocation5], 1
    %s1046 = scalar_lea.sflag [#allocation5], 1
    %1047 = vsyncpa %s1046, 1
    %1048 = vsyncpa [#allocation6], 1
    %s1049 = scalar_lea.sflag [#allocation6], 1
    %1050 = vsyncpa %s1049, 1

</llo_original>
